<compile_context>
chip_gen: v5e
topology: v5e:2x2
jax: 0.10.0
libtpu: 0.0.40
codegen_flags: <defaults>
</compile_context>

<pallas_src>
import jax
import jax.numpy as jnp
import numpy as np
from jax.experimental import pallas as pl
from jax.experimental.pallas import tpu as pltpu


# ----------------------------- Pallas kernels ------------------------------

def _matmul_bias_relu_kernel(x_ref, w_ref, b_ref, o_ref):
    acc = jnp.dot(x_ref[...], w_ref[...], preferred_element_type=jnp.float32)
    o_ref[...] = jnp.maximum(acc + b_ref[...], 0.0)


def matmul_bias_relu(x, w, b, tile_m=512):
    """relu(x @ w + b).  M is gridded ("parallel") so large batches stay inside
    VMEM limits and can split across TensorCores (v7x); at demo size grid=(1,)."""
    M, K = x.shape
    Kw, N = w.shape
    assert K == Kw
    tm = min(tile_m, M)
    return pl.pallas_call(
        _matmul_bias_relu_kernel,
        out_shape=jax.ShapeDtypeStruct((M, N), jnp.float32),
        grid=(pl.cdiv(M, tm),),
        in_specs=[
            pl.BlockSpec((tm, K), lambda i: (i, 0)),
            pl.BlockSpec((K, N), lambda i: (0, 0)),
            pl.BlockSpec((1, N), lambda i: (0, 0)),
        ],
        out_specs=pl.BlockSpec((tm, N), lambda i: (i, 0)),
        compiler_params=pltpu.CompilerParams(
            dimension_semantics=("parallel",)),
    )(x, w, b.reshape(1, N))


def _fused_tail_kernel(p2_ref, w2_ref, b2_ref, w3_ref, b3_ref,
                       w1h_ref, b1h_ref, w2h_ref, b2h_ref, q_ref):
    """conv2 + conv3 + merged dueling heads, entirely in VMEM/registers.

    p2_ref : (P, N, 4*4*C1)   conv2 im2col patches, P = 3*3 output positions
    w2_ref : (4*4*C1, 64)     conv2 weight     b2_ref: (1, 64)
    w3_ref : (P*64, 64)       conv3 weight (consumes the whole 3x3 window)
    w1h_ref: (64, 1024)       [w1v | w1a]      b1h_ref: (1, 1024)
    w2h_ref: (1024, A)        value broadcast + mean-centered advantage
    """
    P = p2_ref.shape[0]
    C2 = w2_ref.shape[1]
    w2 = w2_ref[...]
    b2 = b2_ref[...]

    # conv2 per output position, immediately contracted by conv3 (output is
    # 1x1 spatial, so conv3 is a full contraction over the 3x3 window).
    acc = None
    for pos in range(P):
        z = jnp.dot(p2_ref[pos], w2, preferred_element_type=jnp.float32)
        part = jnp.maximum(z + b2, 0.0)                         # (N, 64)
        w3_blk = w3_ref[pos * C2:(pos + 1) * C2, :]             # (64, 64)
        contrib = jnp.dot(part, w3_blk, preferred_element_type=jnp.float32)
        acc = contrib if acc is None else acc + contrib
    feats = jnp.maximum(acc + b3_ref[...], 0.0)                 # (N, 64)

    # merged heads: h[:, :512] = value hidden, h[:, 512:] = advantage hidden
    h = jnp.maximum(
        jnp.dot(feats, w1h_ref[...], preferred_element_type=jnp.float32)
        + b1h_ref[...], 0.0)                                    # (N, 1024)
    # q = value + (adv - adv.mean): the broadcast of value into every action
    # column and the mean-centering of w2a/b2a are pre-folded into w2h/b2h.
    q_ref[...] = (jnp.dot(h, w2h_ref[...], preferred_element_type=jnp.float32)
                  + b2h_ref[...])                               # (N, A)


def fused_tail(pat2, fw):
    P, N, K2 = pat2.shape
    A = fw["w2h"].shape[1]

    def full(shape):
        return pl.BlockSpec(shape, lambda i: (0,) * len(shape))

    operands = (pat2, fw["w2f"], fw["b2"], fw["w3f"], fw["b3"],
                fw["w1h"], fw["b1h"], fw["w2h"], fw["b2h"])
    return pl.pallas_call(
        _fused_tail_kernel,
        out_shape=jax.ShapeDtypeStruct((N, A), jnp.float32),
        grid=(1,),
        in_specs=[full(op.shape) for op in operands],
        out_specs=full((N, A)),
        compiler_params=pltpu.CompilerParams(
            dimension_semantics=("arbitrary",)),
    )(*operands)


# ------------------------------ JAX glue ------------------------------------

def im2col_k2s(x, s):
    """im2col for a VALID conv whose kernel size equals 2*stride.

    Uses the non-overlapping stride-block decomposition: each (2s x 2s) patch
    is a 2x2 arrangement of s x s blocks, so 4 shifted slices of the block
    tensor replace the O(oh*ow) slice loop.  Returns (N, oh, ow, (2s)*(2s)*C)
    with patch elements ordered (ph, pw, c), c fastest (matches HWIO reshape).
    """
    N, H, W, C = x.shape
    k = 2 * s
    oh = (H - k) // s + 1
    ow = (W - k) // s + 1
    nbh, nbw = oh + 1, ow + 1
    x = x[:, :nbh * s, :nbw * s, :]
    blk = x.reshape(N, nbh, s, nbw, s, C).transpose(0, 1, 3, 2, 4, 5)
    pieces = [blk[:, u:u + oh, v:v + ow] for u in (0, 1) for v in (0, 1)]
    p = jnp.stack(pieces, axis=3)                       # (N,oh,ow,4,s,s,C)
    p = p.reshape(N, oh, ow, 2, 2, s, s, C)             # (...,u,v,rh,rw,C)
    p = p.transpose(0, 1, 2, 3, 5, 4, 6, 7)             # (...,u,rh,v,rw,C)
    return p.reshape(N, oh, ow, k * k * C)


def conv_k2s_relu(x_nhwc, w_hwio, b, stride):
    kh, kw, cin, cout = w_hwio.shape
    assert kh == kw == 2 * stride, "conv_k2s_relu requires kernel == 2*stride"
    N = x_nhwc.shape[0]
    pat = im2col_k2s(x_nhwc, stride)                    # (N, oh, ow, kh*kw*cin)
    oh, ow = pat.shape[1], pat.shape[2]
    out = matmul_bias_relu(pat.reshape(N * oh * ow, kh * kw * cin),
                           w_hwio.reshape(kh * kw * cin, cout), b)
    return out.reshape(N, oh, ow, cout)


def prepare_fused_weights(p):
    """Fold head merging + dueling combine into the weights (exact rewrite).

    q = value + (adv - adv.mean)  with  value = hv @ w2v + b2v,
    adv = ha @ w2a + b2a  =>  q = [hv|ha] @ [tile(w2v); w2a - mean_col(w2a)]
                                  + (b2v + b2a - mean(b2a)).
    """
    A = p["w2a"].shape[1]
    w1h = jnp.concatenate([p["w1v"], p["w1a"]], axis=1)           # (F, 1024)
    b1h = jnp.concatenate([p["b1v"], p["b1a"]]).reshape(1, -1)    # (1, 1024)
    w2a_c = p["w2a"] - p["w2a"].mean(axis=1, keepdims=True)
    b2a_c = p["b2a"] - p["b2a"].mean()
    w2h = jnp.concatenate([jnp.tile(p["w2v"], (1, A)), w2a_c], axis=0)
    b2h = p["b2v"].reshape(1, 1) + b2a_c.reshape(1, A)
    return {
        "w2f": p["w_conv2"].reshape(-1, p["w_conv2"].shape[-1]),  # (512, 64)
        "b2": p["b_conv2"].reshape(1, -1),
        "w3f": p["w_conv3"].reshape(-1, p["w_conv3"].shape[-1]),  # (576, 64)
        "b3": p["b_conv3"].reshape(1, -1),
        "w1h": w1h, "b1h": b1h, "w2h": w2h, "b2h": b2h,
    }


def conv_out_size(h, k, s):
    return (h - k) // s + 1


def init_params(key, input_shape, num_actions):
    c, h, w = input_shape
    h1, w1 = conv_out_size(h, 8, 4), conv_out_size(w, 8, 4)
    h2, w2 = conv_out_size(h1, 4, 2), conv_out_size(w1, 4, 2)
    h3, w3 = conv_out_size(h2, 3, 1), conv_out_size(w2, 3, 1)
    feature_size = 64 * h3 * w3
    ks = jax.random.split(key, 14)
    s = 0.05
    f32 = jnp.float32
    return {
        # conv weights stored HWIO (= PyTorch OIHW transposed to (KH,KW,IC,OC))
        "w_conv1": s * jax.random.normal(ks[0], (8, 8, c, 32), f32),
        "b_conv1": s * jax.random.normal(ks[1], (32,), f32),
        "w_conv2": s * jax.random.normal(ks[2], (4, 4, 32, 64), f32),
        "b_conv2": s * jax.random.normal(ks[3], (64,), f32),
        "w_conv3": s * jax.random.normal(ks[4], (3, 3, 64, 64), f32),
        "b_conv3": s * jax.random.normal(ks[5], (64,), f32),
        # linear weights stored (in, out)
        "w1v": s * jax.random.normal(ks[6], (feature_size, 512), f32),
        "b1v": s * jax.random.normal(ks[7], (512,), f32),
        "w2v": s * jax.random.normal(ks[8], (512, 1), f32),
        "b2v": s * jax.random.normal(ks[9], (1,), f32),
        "w1a": s * jax.random.normal(ks[10], (feature_size, 512), f32),
        "b1a": s * jax.random.normal(ks[11], (512,), f32),
        "w2a": s * jax.random.normal(ks[12], (512, num_actions), f32),
        "b2a": s * jax.random.normal(ks[13], (num_actions,), f32),
    }


def duelnet_forward(params, x_nchw):
    x = jnp.transpose(x_nchw, (0, 2, 3, 1)).astype(jnp.float32)  # NCHW -> NHWC
    N = x.shape[0]

    # conv1: Pallas kernel A (im2col via stride-block reshuffle + MXU matmul)
    y1 = conv_k2s_relu(x, params["w_conv1"], params["b_conv1"], stride=4)

    # conv2 im2col patches: (P, N, 4*4*32), P = oh2*ow2
    pat2 = im2col_k2s(y1, 2)
    oh2, ow2, K2 = pat2.shape[1], pat2.shape[2], pat2.shape[3]
    kh3 = params["w_conv3"].shape[0]
    # The fused tail kernel assumes conv3 consumes the full conv2 output
    # (i.e. conv3 output spatial is 1x1, true for 36x36 inputs).
    assert (oh2, ow2) == (kh3, kh3), \
        "fused tail kernel requires conv3 output spatial == 1x1"
    # TODO(synk): generalize the fused tail kernel to conv3 outputs > 1x1
    # (would need the NCHW flatten ordering for the head input).
    pat2 = pat2.reshape(N, oh2 * ow2, K2).transpose(1, 0, 2)

    fw = prepare_fused_weights(params)
    return fused_tail(pat2, fw)          # Pallas kernel B (conv2+conv3+heads)


# ------------------------- pure-JAX reference -------------------------------

def duelnet_ref(params, x_nchw):
    x = jnp.transpose(x_nchw, (0, 2, 3, 1)).astype(jnp.float32)

    def conv(x, w, b, s):
        y = jax.lax.conv_general_dilated(
            x, w, (s, s), "VALID",
            dimension_numbers=("NHWC", "HWIO", "NHWC"),
            precision=jax.lax.Precision.HIGHEST)
        return jax.nn.relu(y + b)

    x = conv(x, params["w_conv1"], params["b_conv1"], 4)
    x = conv(x, params["w_conv2"], params["b_conv2"], 2)
    x = conv(x, params["w_conv3"], params["b_conv3"], 1)
    feats = jnp.transpose(x, (0, 3, 1, 2)).reshape(x.shape[0], -1)
    hv = jax.nn.relu(feats @ params["w1v"] + params["b1v"])
    value = hv @ params["w2v"] + params["b2v"]
    ha = jax.nn.relu(feats @ params["w1a"] + params["b1a"])
    adv = ha @ params["w2a"] + params["b2a"]
    return value + (adv - adv.mean(axis=1, keepdims=True))


# --------------------------------- main --------------------------------------

if __name__ == "__main__":
    input_shape = (4, 36, 36)     # (C, H, W): 36 -> 8 -> 3 -> 1 spatial
    num_actions = 6
    batch = 2

    key = jax.random.PRNGKey(0)
    k_param, k_x = jax.random.split(key)
    params = init_params(k_param, input_shape, num_actions)
    x = jax.random.normal(k_x, (batch, *input_shape), jnp.float32)  # NCHW

    q = jax.jit(duelnet_forward)(params, x)
    q = jax.block_until_ready(q)

    q_ref = jax.block_until_ready(duelnet_ref(params, x))
    np.testing.assert_allclose(np.asarray(q), np.asarray(q_ref),
                               rtol=5e-2, atol=5e-2)
    assert q.shape == (batch, num_actions)
    print("KERNEL_OK")
</pallas_src>

<mosaic_0001>
module attributes {stable_mosaic.version = 11 : i64} {
  func.func @_matmul_bias_relu_kernel(%arg0: i32, %arg1: memref<128x256xf32, #tpu.memory_space<vmem>>, %arg2: memref<256x32xf32, #tpu.memory_space<vmem>>, %arg3: memref<1x32xf32, #tpu.memory_space<vmem>>, %arg4: memref<128x32xf32, #tpu.memory_space<vmem>>) attributes {dimension_semantics = [#tpu.dimension_semantics<parallel>], iteration_bounds = array<i64: 1>, scalar_prefetch = 0 : i64, scratch_operands = 0 : i64, tpu.core_type = #tpu.core_type<tc>, window_params = [{transform_indices = @transform_0, window_bounds = array<i64: 128, 256>}, {pipeline_mode = #tpu.pipeline_mode<synchronous>, transform_indices = @transform_1, window_bounds = array<i64: 256, 32>}, {pipeline_mode = #tpu.pipeline_mode<synchronous>, transform_indices = @transform_2, window_bounds = array<i64: 1, 32>}, {transform_indices = @transform_3, window_bounds = array<i64: 128, 32>}]} {
    %c0 = arith.constant 0 : index
    %c0_0 = arith.constant 0 : index
    %0 = vector.load %arg1[%c0, %c0_0] : memref<128x256xf32, #tpu.memory_space<vmem>>, vector<128x256xf32>
    %c0_1 = arith.constant 0 : index
    %c0_2 = arith.constant 0 : index
    %1 = vector.load %arg2[%c0_1, %c0_2] : memref<256x32xf32, #tpu.memory_space<vmem>>, vector<256x32xf32>
    %cst = arith.constant dense<0.000000e+00> : vector<128x32xf32>
    %2 = tpu.matmul %0, %1, %cst {dimension_numbers = #tpu.dot_dimension_numbers<[1], [0], [0], [1], [0, 0, 1, 1], [], []>} : vector<128x256xf32>, vector<256x32xf32>, vector<128x32xf32> -> vector<128x32xf32>
    %c0_3 = arith.constant 0 : index
    %c0_4 = arith.constant 0 : index
    %3 = vector.load %arg3[%c0_3, %c0_4] : memref<1x32xf32, #tpu.memory_space<vmem>>, vector<1x32xf32>
    %4 = vector.broadcast %3 : vector<1x32xf32> to vector<128x32xf32>
    %5 = arith.addf %2, %4 : vector<128x32xf32>
    %cst_5 = arith.constant 0.000000e+00 : f32
    %6 = vector.broadcast %cst_5 : f32 to vector<128x32xf32>
    %7 = arith.maximumf %5, %6 : vector<128x32xf32>
    %c0_6 = arith.constant 0 : index
    %c0_7 = arith.constant 0 : index
    %8 = vector.load %arg4[%c0_6, %c0_7] : memref<128x32xf32, #tpu.memory_space<vmem>>, vector<128x32xf32>
    tpu.vector_store %arg4[%c0_6, %c0_7], %7 {strides = array<i32>} : memref<128x32xf32, #tpu.memory_space<vmem>>, vector<128x32xf32>,
    return
  }
  func.func @transform_0(%arg0: i32) -> (i32, i32) {
    %c0_i32 = arith.constant 0 : i32
    %c0_i32_0 = arith.constant 0 : i32
    return %arg0, %c0_i32 : i32, i32
  }
  func.func @transform_1(%arg0: i32) -> (i32, i32) {
    %c0_i32 = arith.constant 0 : i32
    %c0_i32_0 = arith.constant 0 : i32
    %c0_i32_1 = arith.constant 0 : i32
    return %c0_i32, %c0_i32_0 : i32, i32
  }
  func.func @transform_2(%arg0: i32) -> (i32, i32) {
    %c0_i32 = arith.constant 0 : i32
    %c0_i32_0 = arith.constant 0 : i32
    %c0_i32_1 = arith.constant 0 : i32
    return %c0_i32, %c0_i32_0 : i32, i32
  }
  func.func @transform_3(%arg0: i32) -> (i32, i32) {
    %c0_i32 = arith.constant 0 : i32
    %c0_i32_0 = arith.constant 0 : i32
    return %arg0, %c0_i32 : i32, i32
  }
}

module attributes {stable_mosaic.version = 11 : i64} {
  func.func @_fused_tail_kernel(%arg0: i32, %arg1: memref<9x2x512xf32, #tpu.memory_space<vmem>>, %arg2: memref<512x64xf32, #tpu.memory_space<vmem>>, %arg3: memref<1x64xf32, #tpu.memory_space<vmem>>, %arg4: memref<576x64xf32, #tpu.memory_space<vmem>>, %arg5: memref<1x64xf32, #tpu.memory_space<vmem>>, %arg6: memref<64x1024xf32, #tpu.memory_space<vmem>>, %arg7: memref<1x1024xf32, #tpu.memory_space<vmem>>, %arg8: memref<1024x6xf32, #tpu.memory_space<vmem>>, %arg9: memref<1x6xf32, #tpu.memory_space<vmem>>, %arg10: memref<2x6xf32, #tpu.memory_space<vmem>>) attributes {dimension_semantics = [#tpu.dimension_semantics<arbitrary>], iteration_bounds = array<i64: 1>, scalar_prefetch = 0 : i64, scratch_operands = 0 : i64, tpu.core_type = #tpu.core_type<tc>, window_params = [{pipeline_mode = #tpu.pipeline_mode<synchronous>, transform_indices = @transform_0, window_bounds = array<i64: 9, 2, 512>}, {pipeline_mode = #tpu.pipeline_mode<synchronous>, transform_indices = @transform_1, window_bounds = array<i64: 512, 64>}, {pipeline_mode = #tpu.pipeline_mode<synchronous>, transform_indices = @transform_2, window_bounds = array<i64: 1, 64>}, {pipeline_mode = #tpu.pipeline_mode<synchronous>, transform_indices = @transform_3, window_bounds = array<i64: 576, 64>}, {pipeline_mode = #tpu.pipeline_mode<synchronous>, transform_indices = @transform_4, window_bounds = array<i64: 1, 64>}, {pipeline_mode = #tpu.pipeline_mode<synchronous>, transform_indices = @transform_5, window_bounds = array<i64: 64, 1024>}, {pipeline_mode = #tpu.pipeline_mode<synchronous>, transform_indices = @transform_6, window_bounds = array<i64: 1, 1024>}, {pipeline_mode = #tpu.pipeline_mode<synchronous>, transform_indices = @transform_7, window_bounds = array<i64: 1024, 6>}, {pipeline_mode = #tpu.pipeline_mode<synchronous>, transform_indices = @transform_8, window_bounds = array<i64: 1, 6>}, {pipeline_mode = #tpu.pipeline_mode<synchronous>, transform_indices = @transform_9, window_bounds = array<i64: 2, 6>}]} {
    %c0 = arith.constant 0 : index
    %c0_0 = arith.constant 0 : index
    %0 = vector.load %arg2[%c0, %c0_0] : memref<512x64xf32, #tpu.memory_space<vmem>>, vector<512x64xf32>
    %c0_1 = arith.constant 0 : index
    %c0_2 = arith.constant 0 : index
    %1 = vector.load %arg3[%c0_1, %c0_2] : memref<1x64xf32, #tpu.memory_space<vmem>>, vector<1x64xf32>
    %c0_3 = arith.constant 0 : index
    %c0_4 = arith.constant 0 : index
    %c0_5 = arith.constant 0 : index
    %2 = vector.load %arg1[%c0_3, %c0_4, %c0_5] : memref<9x2x512xf32, #tpu.memory_space<vmem>>, vector<1x2x512xf32>
    %3 = vector.shape_cast %2 : vector<1x2x512xf32> to vector<2x512xf32>
    %cst = arith.constant dense<0.000000e+00> : vector<2x64xf32>
    %4 = tpu.matmul %3, %0, %cst {dimension_numbers = #tpu.dot_dimension_numbers<[1], [0], [0], [1], [0, 0, 1, 1], [], []>} : vector<2x512xf32>, vector<512x64xf32>, vector<2x64xf32> -> vector<2x64xf32>
    %5 = vector.broadcast %1 : vector<1x64xf32> to vector<2x64xf32>
    %6 = arith.addf %4, %5 : vector<2x64xf32>
    %cst_6 = arith.constant 0.000000e+00 : f32
    %7 = vector.broadcast %cst_6 : f32 to vector<2x64xf32>
    %8 = arith.maximumf %6, %7 : vector<2x64xf32>
    %c0_7 = arith.constant 0 : index
    %c0_8 = arith.constant 0 : index
    %9 = vector.load %arg4[%c0_7, %c0_8] : memref<576x64xf32, #tpu.memory_space<vmem>>, vector<64x64xf32>
    %cst_9 = arith.constant dense<0.000000e+00> : vector<2x64xf32>
    %10 = tpu.matmul %8, %9, %cst_9 {dimension_numbers = #tpu.dot_dimension_numbers<[1], [0], [0], [1], [0, 0, 1, 1], [], []>} : vector<2x64xf32>, vector<64x64xf32>, vector<2x64xf32> -> vector<2x64xf32>
    %c1 = arith.constant 1 : index
    %c0_10 = arith.constant 0 : index
    %c0_11 = arith.constant 0 : index
    %11 = vector.load %arg1[%c1, %c0_10, %c0_11] : memref<9x2x512xf32, #tpu.memory_space<vmem>>, vector<1x2x512xf32>
    %12 = vector.shape_cast %11 : vector<1x2x512xf32> to vector<2x512xf32>
    %cst_12 = arith.constant dense<0.000000e+00> : vector<2x64xf32>
    %13 = tpu.matmul %12, %0, %cst_12 {dimension_numbers = #tpu.dot_dimension_numbers<[1], [0], [0], [1], [0, 0, 1, 1], [], []>} : vector<2x512xf32>, vector<512x64xf32>, vector<2x64xf32> -> vector<2x64xf32>
    %14 = vector.broadcast %1 : vector<1x64xf32> to vector<2x64xf32>
    %15 = arith.addf %13, %14 : vector<2x64xf32>
    %cst_13 = arith.constant 0.000000e+00 : f32
    %16 = vector.broadcast %cst_13 : f32 to vector<2x64xf32>
    %17 = arith.maximumf %15, %16 : vector<2x64xf32>
    %c64 = arith.constant 64 : index
    %c0_14 = arith.constant 0 : index
    %18 = vector.load %arg4[%c64, %c0_14] : memref<576x64xf32, #tpu.memory_space<vmem>>, vector<64x64xf32>
    %cst_15 = arith.constant dense<0.000000e+00> : vector<2x64xf32>
    %19 = tpu.matmul %17, %18, %cst_15 {dimension_numbers = #tpu.dot_dimension_numbers<[1], [0], [0], [1], [0, 0, 1, 1], [], []>} : vector<2x64xf32>, vector<64x64xf32>, vector<2x64xf32> -> vector<2x64xf32>
    %20 = arith.addf %10, %19 : vector<2x64xf32>
    %c2 = arith.constant 2 : index
    %c0_16 = arith.constant 0 : index
    %c0_17 = arith.constant 0 : index
    %21 = vector.load %arg1[%c2, %c0_16, %c0_17] : memref<9x2x512xf32, #tpu.memory_space<vmem>>, vector<1x2x512xf32>
    %22 = vector.shape_cast %21 : vector<1x2x512xf32> to vector<2x512xf32>
    %cst_18 = arith.constant dense<0.000000e+00> : vector<2x64xf32>
    %23 = tpu.matmul %22, %0, %cst_18 {dimension_numbers = #tpu.dot_dimension_numbers<[1], [0], [0], [1], [0, 0, 1, 1], [], []>} : vector<2x512xf32>, vector<512x64xf32>, vector<2x64xf32> -> vector<2x64xf32>
    %24 = vector.broadcast %1 : vector<1x64xf32> to vector<2x64xf32>
    %25 = arith.addf %23, %24 : vector<2x64xf32>
    %cst_19 = arith.constant 0.000000e+00 : f32
    %26 = vector.broadcast %cst_19 : f32 to vector<2x64xf32>
    %27 = arith.maximumf %25, %26 : vector<2x64xf32>
    %c128 = arith.constant 128 : index
    %c0_20 = arith.constant 0 : index
    %28 = vector.load %arg4[%c128, %c0_20] : memref<576x64xf32, #tpu.memory_space<vmem>>, vector<64x64xf32>
    %cst_21 = arith.constant dense<0.000000e+00> : vector<2x64xf32>
    %29 = tpu.matmul %27, %28, %cst_21 {dimension_numbers = #tpu.dot_dimension_numbers<[1], [0], [0], [1], [0, 0, 1, 1], [], []>} : vector<2x64xf32>, vector<64x64xf32>, vector<2x64xf32> -> vector<2x64xf32>
    %30 = arith.addf %20, %29 : vector<2x64xf32>
    %c3 = arith.constant 3 : index
    %c0_22 = arith.constant 0 : index
    %c0_23 = arith.constant 0 : index
    %31 = vector.load %arg1[%c3, %c0_22, %c0_23] : memref<9x2x512xf32, #tpu.memory_space<vmem>>, vector<1x2x512xf32>
    %32 = vector.shape_cast %31 : vector<1x2x512xf32> to vector<2x512xf32>
    %cst_24 = arith.constant dense<0.000000e+00> : vector<2x64xf32>
    %33 = tpu.matmul %32, %0, %cst_24 {dimension_numbers = #tpu.dot_dimension_numbers<[1], [0], [0], [1], [0, 0, 1, 1], [], []>} : vector<2x512xf32>, vector<512x64xf32>, vector<2x64xf32> -> vector<2x64xf32>
    %34 = vector.broadcast %1 : vector<1x64xf32> to vector<2x64xf32>
    %35 = arith.addf %33, %34 : vector<2x64xf32>
    %cst_25 = arith.constant 0.000000e+00 : f32
    %36 = vector.broadcast %cst_25 : f32 to vector<2x64xf32>
    %37 = arith.maximumf %35, %36 : vector<2x64xf32>
    %c192 = arith.constant 192 : index
    %c0_26 = arith.constant 0 : index
    %38 = vector.load %arg4[%c192, %c0_26] : memref<576x64xf32, #tpu.memory_space<vmem>>, vector<64x64xf32>
    %cst_27 = arith.constant dense<0.000000e+00> : vector<2x64xf32>
    %39 = tpu.matmul %37, %38, %cst_27 {dimension_numbers = #tpu.dot_dimension_numbers<[1], [0], [0], [1], [0, 0, 1, 1], [], []>} : vector<2x64xf32>, vector<64x64xf32>, vector<2x64xf32> -> vector<2x64xf32>
    %40 = arith.addf %30, %39 : vector<2x64xf32>
    %c4 = arith.constant 4 : index
    %c0_28 = arith.constant 0 : index
    %c0_29 = arith.constant 0 : index
    %41 = vector.load %arg1[%c4, %c0_28, %c0_29] : memref<9x2x512xf32, #tpu.memory_space<vmem>>, vector<1x2x512xf32>
    %42 = vector.shape_cast %41 : vector<1x2x512xf32> to vector<2x512xf32>
    %cst_30 = arith.constant dense<0.000000e+00> : vector<2x64xf32>
    %43 = tpu.matmul %42, %0, %cst_30 {dimension_numbers = #tpu.dot_dimension_numbers<[1], [0], [0], [1], [0, 0, 1, 1], [], []>} : vector<2x512xf32>, vector<512x64xf32>, vector<2x64xf32> -> vector<2x64xf32>
    %44 = vector.broadcast %1 : vector<1x64xf32> to vector<2x64xf32>
    %45 = arith.addf %43, %44 : vector<2x64xf32>
    %cst_31 = arith.constant 0.000000e+00 : f32
    %46 = vector.broadcast %cst_31 : f32 to vector<2x64xf32>
    %47 = arith.maximumf %45, %46 : vector<2x64xf32>
    %c256 = arith.constant 256 : index
    %c0_32 = arith.constant 0 : index
    %48 = vector.load %arg4[%c256, %c0_32] : memref<576x64xf32, #tpu.memory_space<vmem>>, vector<64x64xf32>
    %cst_33 = arith.constant dense<0.000000e+00> : vector<2x64xf32>
    %49 = tpu.matmul %47, %48, %cst_33 {dimension_numbers = #tpu.dot_dimension_numbers<[1], [0], [0], [1], [0, 0, 1, 1], [], []>} : vector<2x64xf32>, vector<64x64xf32>, vector<2x64xf32> -> vector<2x64xf32>
    %50 = arith.addf %40, %49 : vector<2x64xf32>
    %c5 = arith.constant 5 : index
    %c0_34 = arith.constant 0 : index
    %c0_35 = arith.constant 0 : index
    %51 = vector.load %arg1[%c5, %c0_34, %c0_35] : memref<9x2x512xf32, #tpu.memory_space<vmem>>, vector<1x2x512xf32>
    %52 = vector.shape_cast %51 : vector<1x2x512xf32> to vector<2x512xf32>
    %cst_36 = arith.constant dense<0.000000e+00> : vector<2x64xf32>
    %53 = tpu.matmul %52, %0, %cst_36 {dimension_numbers = #tpu.dot_dimension_numbers<[1], [0], [0], [1], [0, 0, 1, 1], [], []>} : vector<2x512xf32>, vector<512x64xf32>, vector<2x64xf32> -> vector<2x64xf32>
    %54 = vector.broadcast %1 : vector<1x64xf32> to vector<2x64xf32>
    %55 = arith.addf %53, %54 : vector<2x64xf32>
    %cst_37 = arith.constant 0.000000e+00 : f32
    %56 = vector.broadcast %cst_37 : f32 to vector<2x64xf32>
    %57 = arith.maximumf %55, %56 : vector<2x64xf32>
    %c320 = arith.constant 320 : index
    %c0_38 = arith.constant 0 : index
    %58 = vector.load %arg4[%c320, %c0_38] : memref<576x64xf32, #tpu.memory_space<vmem>>, vector<64x64xf32>
    %cst_39 = arith.constant dense<0.000000e+00> : vector<2x64xf32>
    %59 = tpu.matmul %57, %58, %cst_39 {dimension_numbers = #tpu.dot_dimension_numbers<[1], [0], [0], [1], [0, 0, 1, 1], [], []>} : vector<2x64xf32>, vector<64x64xf32>, vector<2x64xf32> -> vector<2x64xf32>
    %60 = arith.addf %50, %59 : vector<2x64xf32>
    %c6 = arith.constant 6 : index
    %c0_40 = arith.constant 0 : index
    %c0_41 = arith.constant 0 : index
    %61 = vector.load %arg1[%c6, %c0_40, %c0_41] : memref<9x2x512xf32, #tpu.memory_space<vmem>>, vector<1x2x512xf32>
    %62 = vector.shape_cast %61 : vector<1x2x512xf32> to vector<2x512xf32>
    %cst_42 = arith.constant dense<0.000000e+00> : vector<2x64xf32>
    %63 = tpu.matmul %62, %0, %cst_42 {dimension_numbers = #tpu.dot_dimension_numbers<[1], [0], [0], [1], [0, 0, 1, 1], [], []>} : vector<2x512xf32>, vector<512x64xf32>, vector<2x64xf32> -> vector<2x64xf32>
    %64 = vector.broadcast %1 : vector<1x64xf32> to vector<2x64xf32>
    %65 = arith.addf %63, %64 : vector<2x64xf32>
    %cst_43 = arith.constant 0.000000e+00 : f32
    %66 = vector.broadcast %cst_43 : f32 to vector<2x64xf32>
    %67 = arith.maximumf %65, %66 : vector<2x64xf32>
    %c384 = arith.constant 384 : index
    %c0_44 = arith.constant 0 : index
    %68 = vector.load %arg4[%c384, %c0_44] : memref<576x64xf32, #tpu.memory_space<vmem>>, vector<64x64xf32>
    %cst_45 = arith.constant dense<0.000000e+00> : vector<2x64xf32>
    %69 = tpu.matmul %67, %68, %cst_45 {dimension_numbers = #tpu.dot_dimension_numbers<[1], [0], [0], [1], [0, 0, 1, 1], [], []>} : vector<2x64xf32>, vector<64x64xf32>, vector<2x64xf32> -> vector<2x64xf32>
    %70 = arith.addf %60, %69 : vector<2x64xf32>
    %c7 = arith.constant 7 : index
    %c0_46 = arith.constant 0 : index
    %c0_47 = arith.constant 0 : index
    %71 = vector.load %arg1[%c7, %c0_46, %c0_47] : memref<9x2x512xf32, #tpu.memory_space<vmem>>, vector<1x2x512xf32>
    %72 = vector.shape_cast %71 : vector<1x2x512xf32> to vector<2x512xf32>
    %cst_48 = arith.constant dense<0.000000e+00> : vector<2x64xf32>
    %73 = tpu.matmul %72, %0, %cst_48 {dimension_numbers = #tpu.dot_dimension_numbers<[1], [0], [0], [1], [0, 0, 1, 1], [], []>} : vector<2x512xf32>, vector<512x64xf32>, vector<2x64xf32> -> vector<2x64xf32>
    %74 = vector.broadcast %1 : vector<1x64xf32> to vector<2x64xf32>
    %75 = arith.addf %73, %74 : vector<2x64xf32>
    %cst_49 = arith.constant 0.000000e+00 : f32
    %76 = vector.broadcast %cst_49 : f32 to vector<2x64xf32>
    %77 = arith.maximumf %75, %76 : vector<2x64xf32>
    %c448 = arith.constant 448 : index
    %c0_50 = arith.constant 0 : index
    %78 = vector.load %arg4[%c448, %c0_50] : memref<576x64xf32, #tpu.memory_space<vmem>>, vector<64x64xf32>
    %cst_51 = arith.constant dense<0.000000e+00> : vector<2x64xf32>
    %79 = tpu.matmul %77, %78, %cst_51 {dimension_numbers = #tpu.dot_dimension_numbers<[1], [0], [0], [1], [0, 0, 1, 1], [], []>} : vector<2x64xf32>, vector<64x64xf32>, vector<2x64xf32> -> vector<2x64xf32>
    %80 = arith.addf %70, %79 : vector<2x64xf32>
    %c8 = arith.constant 8 : index
    %c0_52 = arith.constant 0 : index
    %c0_53 = arith.constant 0 : index
    %81 = vector.load %arg1[%c8, %c0_52, %c0_53] : memref<9x2x512xf32, #tpu.memory_space<vmem>>, vector<1x2x512xf32>
    %82 = vector.shape_cast %81 : vector<1x2x512xf32> to vector<2x512xf32>
    %cst_54 = arith.constant dense<0.000000e+00> : vector<2x64xf32>
    %83 = tpu.matmul %82, %0, %cst_54 {dimension_numbers = #tpu.dot_dimension_numbers<[1], [0], [0], [1], [0, 0, 1, 1], [], []>} : vector<2x512xf32>, vector<512x64xf32>, vector<2x64xf32> -> vector<2x64xf32>
    %84 = vector.broadcast %1 : vector<1x64xf32> to vector<2x64xf32>
    %85 = arith.addf %83, %84 : vector<2x64xf32>
    %cst_55 = arith.constant 0.000000e+00 : f32
    %86 = vector.broadcast %cst_55 : f32 to vector<2x64xf32>
    %87 = arith.maximumf %85, %86 : vector<2x64xf32>
    %c512 = arith.constant 512 : index
    %c0_56 = arith.constant 0 : index
    %88 = vector.load %arg4[%c512, %c0_56] : memref<576x64xf32, #tpu.memory_space<vmem>>, vector<64x64xf32>
    %cst_57 = arith.constant dense<0.000000e+00> : vector<2x64xf32>
    %89 = tpu.matmul %87, %88, %cst_57 {dimension_numbers = #tpu.dot_dimension_numbers<[1], [0], [0], [1], [0, 0, 1, 1], [], []>} : vector<2x64xf32>, vector<64x64xf32>, vector<2x64xf32> -> vector<2x64xf32>
    %90 = arith.addf %80, %89 : vector<2x64xf32>
    %c0_58 = arith.constant 0 : index
    %c0_59 = arith.constant 0 : index
    %91 = vector.load %arg5[%c0_58, %c0_59] : memref<1x64xf32, #tpu.memory_space<vmem>>, vector<1x64xf32>
    %92 = vector.broadcast %91 : vector<1x64xf32> to vector<2x64xf32>
    %93 = arith.addf %90, %92 : vector<2x64xf32>
    %cst_60 = arith.constant 0.000000e+00 : f32
    %94 = vector.broadcast %cst_60 : f32 to vector<2x64xf32>
    %95 = arith.maximumf %93, %94 : vector<2x64xf32>
    %c0_61 = arith.constant 0 : index
    %c0_62 = arith.constant 0 : index
    %96 = vector.load %arg6[%c0_61, %c0_62] : memref<64x1024xf32, #tpu.memory_space<vmem>>, vector<64x1024xf32>
    %cst_63 = arith.constant dense<0.000000e+00> : vector<2x1024xf32>
    %97 = tpu.matmul %95, %96, %cst_63 {dimension_numbers = #tpu.dot_dimension_numbers<[1], [0], [0], [1], [0, 0, 1, 1], [], []>} : vector<2x64xf32>, vector<64x1024xf32>, vector<2x1024xf32> -> vector<2x1024xf32>
    %c0_64 = arith.constant 0 : index
    %c0_65 = arith.constant 0 : index
    %98 = vector.load %arg7[%c0_64, %c0_65] : memref<1x1024xf32, #tpu.memory_space<vmem>>, vector<1x1024xf32>
    %99 = vector.broadcast %98 : vector<1x1024xf32> to vector<2x1024xf32>
    %100 = arith.addf %97, %99 : vector<2x1024xf32>
    %cst_66 = arith.constant 0.000000e+00 : f32
    %101 = vector.broadcast %cst_66 : f32 to vector<2x1024xf32>
    %102 = arith.maximumf %100, %101 : vector<2x1024xf32>
    %c0_67 = arith.constant 0 : index
    %c0_68 = arith.constant 0 : index
    %103 = vector.load %arg8[%c0_67, %c0_68] : memref<1024x6xf32, #tpu.memory_space<vmem>>, vector<1024x6xf32>
    %cst_69 = arith.constant dense<0.000000e+00> : vector<2x6xf32>
    %104 = tpu.matmul %102, %103, %cst_69 {dimension_numbers = #tpu.dot_dimension_numbers<[1], [0], [0], [1], [0, 0, 1, 1], [], []>} : vector<2x1024xf32>, vector<1024x6xf32>, vector<2x6xf32> -> vector<2x6xf32>
    %c0_70 = arith.constant 0 : index
    %c0_71 = arith.constant 0 : index
    %105 = vector.load %arg9[%c0_70, %c0_71] : memref<1x6xf32, #tpu.memory_space<vmem>>, vector<1x6xf32>
    %106 = vector.broadcast %105 : vector<1x6xf32> to vector<2x6xf32>
    %107 = arith.addf %104, %106 : vector<2x6xf32>
    %c0_72 = arith.constant 0 : index
    %c0_73 = arith.constant 0 : index
    %108 = vector.load %arg10[%c0_72, %c0_73] : memref<2x6xf32, #tpu.memory_space<vmem>>, vector<2x6xf32>
    tpu.vector_store %arg10[%c0_72, %c0_73], %107 {strides = array<i32>} : memref<2x6xf32, #tpu.memory_space<vmem>>, vector<2x6xf32>,
    return
  }
  func.func @transform_0(%arg0: i32) -> (i32, i32, i32) {
    %c0_i32 = arith.constant 0 : i32
    %c0_i32_0 = arith.constant 0 : i32
    %c0_i32_1 = arith.constant 0 : i32
    %c0_i32_2 = arith.constant 0 : i32
    return %c0_i32, %c0_i32_0, %c0_i32_1 : i32, i32, i32
  }
  func.func @transform_1(%arg0: i32) -> (i32, i32) {
    %c0_i32 = arith.constant 0 : i32
    %c0_i32_0 = arith.constant 0 : i32
    %c0_i32_1 = arith.constant 0 : i32
    return %c0_i32, %c0_i32_0 : i32, i32
  }
  func.func @transform_2(%arg0: i32) -> (i32, i32) {
    %c0_i32 = arith.constant 0 : i32
    %c0_i32_0 = arith.constant 0 : i32
    %c0_i32_1 = arith.constant 0 : i32
    return %c0_i32, %c0_i32_0 : i32, i32
  }
  func.func @transform_3(%arg0: i32) -> (i32, i32) {
    %c0_i32 = arith.constant 0 : i32
    %c0_i32_0 = arith.constant 0 : i32
    %c0_i32_1 = arith.constant 0 : i32
    return %c0_i32, %c0_i32_0 : i32, i32
  }
  func.func @transform_4(%arg0: i32) -> (i32, i32) {
    %c0_i32 = arith.constant 0 : i32
    %c0_i32_0 = arith.constant 0 : i32
    %c0_i32_1 = arith.constant 0 : i32
    return %c0_i32, %c0_i32_0 : i32, i32
  }
  func.func @transform_5(%arg0: i32) -> (i32, i32) {
    %c0_i32 = arith.constant 0 : i32
    %c0_i32_0 = arith.constant 0 : i32
    %c0_i32_1 = arith.constant 0 : i32
    return %c0_i32, %c0_i32_0 : i32, i32
  }
  func.func @transform_6(%arg0: i32) -> (i32, i32) {
    %c0_i32 = arith.constant 0 : i32
    %c0_i32_0 = arith.constant 0 : i32
    %c0_i32_1 = arith.constant 0 : i32
    return %c0_i32, %c0_i32_0 : i32, i32
  }
  func.func @transform_7(%arg0: i32) -> (i32, i32) {
    %c0_i32 = arith.constant 0 : i32
    %c0_i32_0 = arith.constant 0 : i32
    %c0_i32_1 = arith.constant 0 : i32
    return %c0_i32, %c0_i32_0 : i32, i32
  }
  func.func @transform_8(%arg0: i32) -> (i32, i32) {
    %c0_i32 = arith.constant 0 : i32
    %c0_i32_0 = arith.constant 0 : i32
    %c0_i32_1 = arith.constant 0 : i32
    return %c0_i32, %c0_i32_0 : i32, i32
  }
  func.func @transform_9(%arg0: i32) -> (i32, i32) {
    %c0_i32 = arith.constant 0 : i32
    %c0_i32_0 = arith.constant 0 : i32
    %c0_i32_1 = arith.constant 0 : i32
    return %c0_i32, %c0_i32_0 : i32, i32
  }
}

</mosaic_0001>

<llo_original>
// kernel: duelnet_forward.2
$region0: #{duelnet_forward.2}
  #allocation0 [shape = 'u32[]', space=smem, size = 0x4, offset = 0x4, fixed_abs, tag = 'smem constant byte address 0x4 - core index']
  #allocation1 [shape = 'u32[72,128]{1,0:T(1,128)}', space=vmem, size = 0x9000, scoped, tag = 'internal scratch']
  %s0 = inlined_call_operand.vmem [shape: f32[128,256], index: 0, kind: input, shape index: {}]
  %s1 = inlined_call_operand.vmem [shape: f32[256,32], index: 1, kind: input, shape index: {}]
  %s2 = inlined_call_operand.vmem [shape: f32[1,32], index: 2, kind: input, shape index: {}]
  %s3 = inlined_call_operand.vmem [shape: f32[128,32], index: 3, kind: output, shape index: {}]
  %s4 = sld [smem:[#allocation0]]
  $region22: #{duelnet_forward.2} parent=0
    _
  %s6 = ssub.s32 1, %s4
  %s7 = scalar_select 0, %s6, %s4
  // Predicated region
  $region2: #{duelnet_forward.2} parent=0 // pred_check
    _
  $region3: #{duelnet_forward.2} parent=0 // pred_check_branch
    %9 = sbr.rel (0) target = $region5
  $region4: #{duelnet_forward.2} parent=0 // pred_region
    _
  $region5: #{duelnet_forward.2} parent=0 // pred_fallthru
    _
  // Predicated region
  $region6: #{duelnet_forward.2} parent=0 // pred_check
    _
  $region7: #{duelnet_forward.2} parent=0 // pred_check_branch
    %11 = sbr.rel (0) target = $region9
  $region8: #{duelnet_forward.2} parent=0 // pred_region
    _
  $region9: #{duelnet_forward.2} parent=0 // pred_fallthru
    _
  // Predicated region
  $region10: #{duelnet_forward.2} parent=0 // pred_check
    _
  $region11: #{duelnet_forward.2} parent=0 // pred_check_branch
    %13 = sbr.rel (0) target = $region13
  $region12: #{duelnet_forward.2} parent=0 // pred_region
    _
  $region13: #{duelnet_forward.2} parent=0 // pred_fallthru
    _
  %v14 = vld [vmem:[%s0] sm:$0xff]
  %v15 = vld [vmem:[%s0 + $0x8] sm:$0xff]
  %v16 = vld [vmem:[%s0 + $0x10] sm:$0xff]
  %v17 = vld [vmem:[%s0 + $0x18] sm:$0xff]
  %v18 = vld [vmem:[%s0 + $0x20] sm:$0xff]
  %v19 = vld [vmem:[%s0 + $0x28] sm:$0xff]
  %v20 = vld [vmem:[%s0 + $0x30] sm:$0xff]
  %v21 = vld [vmem:[%s0 + $0x38] sm:$0xff]
  %v22 = vld [vmem:[%s0 + $0x40] sm:$0xff]
  %v23 = vld [vmem:[%s0 + $0x48] sm:$0xff]
  %v24 = vld [vmem:[%s0 + $0x50] sm:$0xff]
  %v25 = vld [vmem:[%s0 + $0x58] sm:$0xff]
  %v26 = vld [vmem:[%s0 + $0x60] sm:$0xff]
  %v27 = vld [vmem:[%s0 + $0x68] sm:$0xff]
  %v28 = vld [vmem:[%s0 + $0x70] sm:$0xff]
  %v29 = vld [vmem:[%s0 + $0x78] sm:$0xff]
  %v30 = vld [vmem:[%s0 + $0x80] sm:$0xff]
  %v31 = vld [vmem:[%s0 + $0x88] sm:$0xff]
  %v32 = vld [vmem:[%s0 + $0x90] sm:$0xff]
  %v33 = vld [vmem:[%s0 + $0x98] sm:$0xff]
  %v34 = vld [vmem:[%s0 + $0xa0] sm:$0xff]
  %v35 = vld [vmem:[%s0 + $0xa8] sm:$0xff]
  %v36 = vld [vmem:[%s0 + $0xb0] sm:$0xff]
  %v37 = vld [vmem:[%s0 + $0xb8] sm:$0xff]
  %v38 = vld [vmem:[%s0 + $0xc0] sm:$0xff]
  %v39 = vld [vmem:[%s0 + $0xc8] sm:$0xff]
  %v40 = vld [vmem:[%s0 + $0xd0] sm:$0xff]
  %v41 = vld [vmem:[%s0 + $0xd8] sm:$0xff]
  %v42 = vld [vmem:[%s0 + $0xe0] sm:$0xff]
  %v43 = vld [vmem:[%s0 + $0xe8] sm:$0xff]
  %v44 = vld [vmem:[%s0 + $0xf0] sm:$0xff]
  %v45 = vld [vmem:[%s0 + $0xf8] sm:$0xff]
  %v46 = vld [vmem:[%s1] sm:$0xff]
  %v47 = vld [vmem:[%s1 + $0x8] sm:$0xff]
  %v48 = vld [vmem:[%s1 + $0x10] sm:$0xff]
  %v49 = vld [vmem:[%s1 + $0x18] sm:$0xff]
  %v50 = vld [vmem:[%s1 + $0x20] sm:$0xff]
  %v51 = vld [vmem:[%s1 + $0x28] sm:$0xff]
  %v52 = vld [vmem:[%s1 + $0x30] sm:$0xff]
  %v53 = vld [vmem:[%s1 + $0x38] sm:$0xff]
  %v54 = vld [vmem:[%s1 + $0x40] sm:$0xff]
  %v55 = vld [vmem:[%s1 + $0x48] sm:$0xff]
  %v56 = vld [vmem:[%s1 + $0x50] sm:$0xff]
  %v57 = vld [vmem:[%s1 + $0x58] sm:$0xff]
  %v58 = vld [vmem:[%s1 + $0x60] sm:$0xff]
  %v59 = vld [vmem:[%s1 + $0x68] sm:$0xff]
  %v60 = vld [vmem:[%s1 + $0x70] sm:$0xff]
  %v61 = vld [vmem:[%s1 + $0x78] sm:$0xff]
  %v62 = vld [vmem:[%s1 + $0x80] sm:$0xff]
  %v63 = vld [vmem:[%s1 + $0x88] sm:$0xff]
  %v64 = vld [vmem:[%s1 + $0x90] sm:$0xff]
  %v65 = vld [vmem:[%s1 + $0x98] sm:$0xff]
  %v66 = vld [vmem:[%s1 + $0xa0] sm:$0xff]
  %v67 = vld [vmem:[%s1 + $0xa8] sm:$0xff]
  %v68 = vld [vmem:[%s1 + $0xb0] sm:$0xff]
  %v69 = vld [vmem:[%s1 + $0xb8] sm:$0xff]
  %v70 = vld [vmem:[%s1 + $0xc0] sm:$0xff]
  %v71 = vld [vmem:[%s1 + $0xc8] sm:$0xff]
  %v72 = vld [vmem:[%s1 + $0xd0] sm:$0xff]
  %v73 = vld [vmem:[%s1 + $0xd8] sm:$0xff]
  %v74 = vld [vmem:[%s1 + $0xe0] sm:$0xff]
  %v75 = vld [vmem:[%s1 + $0xe8] sm:$0xff]
  %v76 = vld [vmem:[%s1 + $0xf0] sm:$0xff]
  %v77 = vld [vmem:[%s1 + $0xf8] sm:$0xff]
  %v78 = vld [vmem:[%s2] sm:$0x1]
  %v80 = vperm.slane %v78, 0
  %82 = vmatpush.msra.mxu0 %v61
  %83 = vmatpush.msra.mxu0 %v60
  %84 = vmatpush.msra.mxu0 %v59
  %85 = vmatpush.msra.mxu0 %v58
  %86 = vmatpush.msra.mxu0 %v57
  %87 = vmatpush.msra.mxu0 %v56
  %88 = vmatpush.msra.mxu0 %v55
  %89 = vmatpush.msra.mxu0 %v54
  %90 = vmatpush.msra.mxu0 %v53
  %91 = vmatpush.msra.mxu0 %v52
  %92 = vmatpush.msra.mxu0 %v51
  %93 = vmatpush.msra.mxu0 %v50
  %94 = vmatpush.msra.mxu0 %v49
  %95 = vmatpush.msra.mxu0 %v48
  %96 = vmatpush.msra.mxu0 %v47
  %97 = vmatpush.msra.mxu0 %v46
  %98 = vmatmul.f32.gmra.mxu0 %v14
  %v99 = vpop.f32.mrf.mxu0
  %v100 = vadd.f32 %v80, %v99
  %101 = vmatmul.f32.gmra.mxu0 %v16
  %v102 = vpop.f32.mrf.mxu0
  %v103 = vadd.f32 %v80, %v102
  %104 = vmatmul.f32.gmra.mxu0 %v18
  %v105 = vpop.f32.mrf.mxu0
  %v106 = vadd.f32 %v80, %v105
  %107 = vmatmul.f32.gmra.mxu0 %v20
  %v108 = vpop.f32.mrf.mxu0
  %v109 = vadd.f32 %v80, %v108
  %110 = vmatmul.f32.gmra.mxu0 %v22
  %v111 = vpop.f32.mrf.mxu0
  %v112 = vadd.f32 %v80, %v111
  %113 = vmatmul.f32.gmra.mxu0 %v24
  %v114 = vpop.f32.mrf.mxu0
  %v115 = vadd.f32 %v80, %v114
  %116 = vmatmul.f32.gmra.mxu0 %v26
  %v117 = vpop.f32.mrf.mxu0
  %v118 = vadd.f32 %v80, %v117
  %119 = vmatmul.f32.gmra.mxu0 %v28
  %v120 = vpop.f32.mrf.mxu0
  %v121 = vadd.f32 %v80, %v120
  %122 = vmatmul.f32.gmra.mxu0 %v30
  %v123 = vpop.f32.mrf.mxu0
  %v124 = vadd.f32 %v80, %v123
  %125 = vmatmul.f32.gmra.mxu0 %v32
  %v126 = vpop.f32.mrf.mxu0
  %v127 = vadd.f32 %v80, %v126
  %128 = vmatmul.f32.gmra.mxu0 %v34
  %v129 = vpop.f32.mrf.mxu0
  %v130 = vadd.f32 %v80, %v129
  %131 = vmatmul.f32.gmra.mxu0 %v36
  %v132 = vpop.f32.mrf.mxu0
  %v133 = vadd.f32 %v80, %v132
  %134 = vmatmul.f32.gmra.mxu0 %v38
  %v135 = vpop.f32.mrf.mxu0
  %v136 = vadd.f32 %v80, %v135
  %137 = vmatmul.f32.gmra.mxu0 %v40
  %v138 = vpop.f32.mrf.mxu0
  %v139 = vadd.f32 %v80, %v138
  %140 = vmatmul.f32.gmra.mxu0 %v42
  %v141 = vpop.f32.mrf.mxu0
  %v142 = vadd.f32 %v80, %v141
  %143 = vmatmul.f32.gmra.mxu0 %v44
  %v144 = vpop.f32.mrf.mxu0
  %v145 = vadd.f32 %v80, %v144
  %146 = vdwg.mxu0
  %147 = vmatpush.msra.mxu0 %v77
  %148 = vmatpush.msra.mxu0 %v76
  %149 = vmatpush.msra.mxu0 %v75
  %150 = vmatpush.msra.mxu0 %v74
  %151 = vmatpush.msra.mxu0 %v73
  %152 = vmatpush.msra.mxu0 %v72
  %153 = vmatpush.msra.mxu0 %v71
  %154 = vmatpush.msra.mxu0 %v70
  %155 = vmatpush.msra.mxu0 %v69
  %156 = vmatpush.msra.mxu0 %v68
  %157 = vmatpush.msra.mxu0 %v67
  %158 = vmatpush.msra.mxu0 %v66
  %159 = vmatpush.msra.mxu0 %v65
  %160 = vmatpush.msra.mxu0 %v64
  %161 = vmatpush.msra.mxu0 %v63
  %162 = vmatpush.msra.mxu0 %v62
  %163 = vmatmul.f32.gmra.mxu0 %v15
  %v164 = vpop.f32.mrf.mxu0
  %v165 = vadd.f32 %v100, %v164
  %166 = vmatmul.f32.gmra.mxu0 %v17
  %v167 = vpop.f32.mrf.mxu0
  %v168 = vadd.f32 %v103, %v167
  %169 = vmatmul.f32.gmra.mxu0 %v19
  %v170 = vpop.f32.mrf.mxu0
  %v171 = vadd.f32 %v106, %v170
  %172 = vmatmul.f32.gmra.mxu0 %v21
  %v173 = vpop.f32.mrf.mxu0
  %v174 = vadd.f32 %v109, %v173
  %175 = vmatmul.f32.gmra.mxu0 %v23
  %v176 = vpop.f32.mrf.mxu0
  %v177 = vadd.f32 %v112, %v176
  %178 = vmatmul.f32.gmra.mxu0 %v25
  %v179 = vpop.f32.mrf.mxu0
  %v180 = vadd.f32 %v115, %v179
  %181 = vmatmul.f32.gmra.mxu0 %v27
  %v182 = vpop.f32.mrf.mxu0
  %v183 = vadd.f32 %v118, %v182
  %184 = vmatmul.f32.gmra.mxu0 %v29
  %v185 = vpop.f32.mrf.mxu0
  %v186 = vadd.f32 %v121, %v185
  %187 = vmatmul.f32.gmra.mxu0 %v31
  %v188 = vpop.f32.mrf.mxu0
  %v189 = vadd.f32 %v124, %v188
  %190 = vmatmul.f32.gmra.mxu0 %v33
  %v191 = vpop.f32.mrf.mxu0
  %v192 = vadd.f32 %v127, %v191
  %193 = vmatmul.f32.gmra.mxu0 %v35
  %v194 = vpop.f32.mrf.mxu0
  %v195 = vadd.f32 %v130, %v194
  %196 = vmatmul.f32.gmra.mxu0 %v37
  %v197 = vpop.f32.mrf.mxu0
  %v198 = vadd.f32 %v133, %v197
  %199 = vmatmul.f32.gmra.mxu0 %v39
  %v200 = vpop.f32.mrf.mxu0
  %v201 = vadd.f32 %v136, %v200
  %202 = vmatmul.f32.gmra.mxu0 %v41
  %v203 = vpop.f32.mrf.mxu0
  %v204 = vadd.f32 %v139, %v203
  %205 = vmatmul.f32.gmra.mxu0 %v43
  %v206 = vpop.f32.mrf.mxu0
  %v207 = vadd.f32 %v142, %v206
  %208 = vmatmul.f32.gmra.mxu0 %v45
  %v209 = vpop.f32.mrf.mxu0
  %v210 = vadd.f32 %v145, %v209
  %211 = vdwg.mxu0
  %v212 = vmax.f32 %v165, 0.0
  %v213 = vmax.f32 %v168, 0.0
  %v214 = vmax.f32 %v171, 0.0
  %v215 = vmax.f32 %v174, 0.0
  %v216 = vmax.f32 %v177, 0.0
  %v217 = vmax.f32 %v180, 0.0
  %v218 = vmax.f32 %v183, 0.0
  %v219 = vmax.f32 %v186, 0.0
  %v220 = vmax.f32 %v189, 0.0
  %v221 = vmax.f32 %v192, 0.0
  %v222 = vmax.f32 %v195, 0.0
  %v223 = vmax.f32 %v198, 0.0
  %v224 = vmax.f32 %v201, 0.0
  %v225 = vmax.f32 %v204, 0.0
  %v226 = vmax.f32 %v207, 0.0
  %v227 = vmax.f32 %v210, 0.0
  %vm228 = vcmask 261120
  %229 = vst.msk [vmem:[%s3] sm:$0xff] %vm228, %v212
  %230 = vst.msk [vmem:[%s3 + $0x8] sm:$0xff] %vm228, %v213
  %231 = vst.msk [vmem:[%s3 + $0x10] sm:$0xff] %vm228, %v214
  %232 = vst.msk [vmem:[%s3 + $0x18] sm:$0xff] %vm228, %v215
  %233 = vst.msk [vmem:[%s3 + $0x20] sm:$0xff] %vm228, %v216
  %234 = vst.msk [vmem:[%s3 + $0x28] sm:$0xff] %vm228, %v217
  %235 = vst.msk [vmem:[%s3 + $0x30] sm:$0xff] %vm228, %v218
  %236 = vst.msk [vmem:[%s3 + $0x38] sm:$0xff] %vm228, %v219
  %237 = vst.msk [vmem:[%s3 + $0x40] sm:$0xff] %vm228, %v220
  %238 = vst.msk [vmem:[%s3 + $0x48] sm:$0xff] %vm228, %v221
  %239 = vst.msk [vmem:[%s3 + $0x50] sm:$0xff] %vm228, %v222
  %240 = vst.msk [vmem:[%s3 + $0x58] sm:$0xff] %vm228, %v223
  %241 = vst.msk [vmem:[%s3 + $0x60] sm:$0xff] %vm228, %v224
  %242 = vst.msk [vmem:[%s3 + $0x68] sm:$0xff] %vm228, %v225
  %243 = vst.msk [vmem:[%s3 + $0x70] sm:$0xff] %vm228, %v226
  %244 = vst.msk [vmem:[%s3 + $0x78] sm:$0xff] %vm228, %v227
  // Predicated region
  $region14: #{duelnet_forward.2} parent=0 // pred_check
    _
  $region15: #{duelnet_forward.2} parent=0 // pred_check_branch
    %246 = sbr.rel (0) target = $region17
  $region16: #{duelnet_forward.2} parent=0 // pred_region
    _
  $region17: #{duelnet_forward.2} parent=0 // pred_fallthru
    _
  // Predicated region
  $region18: #{duelnet_forward.2} parent=0 // pred_check
    _
  $region19: #{duelnet_forward.2} parent=0 // pred_check_branch
    %248 = sbr.rel (0) target = $region21
  $region20: #{duelnet_forward.2} parent=0 // pred_region
    _
  $region21: #{duelnet_forward.2} parent=0 // pred_fallthru
    _

// kernel: duelnet_forward.3
$region0: #{duelnet_forward.3}
  #allocation0 [shape = 'u32[]', space=smem, size = 0x4, offset = 0x4, fixed_abs, tag = 'smem constant byte address 0x4 - core index']
  #allocation1 [shape = 'u32[72,128]{1,0:T(1,128)}', space=vmem, size = 0x9000, scoped, tag = 'internal scratch']
  %s0 = inlined_call_operand.vmem [shape: f32[9,2,512], index: 0, kind: input, shape index: {}]
  %s1 = inlined_call_operand.vmem [shape: f32[512,64], index: 1, kind: input, shape index: {}]
  %s2 = inlined_call_operand.vmem [shape: f32[1,64], index: 2, kind: input, shape index: {}]
  %s3 = inlined_call_operand.vmem [shape: f32[576,64], index: 3, kind: input, shape index: {}]
  %s4 = inlined_call_operand.vmem [shape: f32[1,64], index: 4, kind: input, shape index: {}]
  %s5 = inlined_call_operand.vmem [shape: f32[64,1024], index: 5, kind: input, shape index: {}]
  %s6 = inlined_call_operand.vmem [shape: f32[1,1024], index: 6, kind: input, shape index: {}]
  %s7 = inlined_call_operand.vmem [shape: f32[1024,6], index: 7, kind: input, shape index: {}]
  %s8 = inlined_call_operand.vmem [shape: f32[1,6], index: 8, kind: input, shape index: {}]
  %s9 = inlined_call_operand.hbm [shape: f32[2,6], index: 9, kind: output, shape index: {}]
  %s10 = sld [smem:[#allocation0]]
  $region46: #{duelnet_forward.3} parent=0
    _
  %s12 = ssub.s32 1, %s10
  %s13 = scalar_select 0, %s12, %s10
  $region1: #{duelnet_forward.3} parent=0
    #allocation2 [shape = 'u8[1024]{0}', space=vmem, size = 0x400, scoped, tag = 'output window, operand 0, single buffered']
    #allocation3 [shape = 's32[1]{0}', space=sflag, size = 0x4, scoped, tag = 'scoped memory for duelnet_forward.3']
    %14 = vsyncpa [#allocation3], 0
    // Predicated region
    $region2: #{duelnet_forward.3} parent=1 // pred_check
      _
    $region3: #{duelnet_forward.3} parent=1 // pred_check_branch
      %16 = sbr.rel (0) target = $region5
    $region4: #{duelnet_forward.3} parent=1 // pred_region
      _
    $region5: #{duelnet_forward.3} parent=1 // pred_fallthru
      _
    // Predicated region
    $region6: #{duelnet_forward.3} parent=1 // pred_check
      _
    $region7: #{duelnet_forward.3} parent=1 // pred_check_branch
      %18 = sbr.rel (0) target = $region9
    $region8: #{duelnet_forward.3} parent=1 // pred_region
      _
    $region9: #{duelnet_forward.3} parent=1 // pred_fallthru
      _
    // Predicated region
    $region10: #{duelnet_forward.3} parent=1 // pred_check
      _
    $region11: #{duelnet_forward.3} parent=1 // pred_check_branch
      %20 = sbr.rel (0) target = $region13
    $region12: #{duelnet_forward.3} parent=1 // pred_region
      _
    $region13: #{duelnet_forward.3} parent=1 // pred_fallthru
      _
    // Predicated region
    $region14: #{duelnet_forward.3} parent=1 // pred_check
      _
    $region15: #{duelnet_forward.3} parent=1 // pred_check_branch
      %22 = sbr.rel (0) target = $region17
    $region16: #{duelnet_forward.3} parent=1 // pred_region
      _
    $region17: #{duelnet_forward.3} parent=1 // pred_fallthru
      _
    // Predicated region
    $region18: #{duelnet_forward.3} parent=1 // pred_check
      _
    $region19: #{duelnet_forward.3} parent=1 // pred_check_branch
      %24 = sbr.rel (0) target = $region21
    $region20: #{duelnet_forward.3} parent=1 // pred_region
      _
    $region21: #{duelnet_forward.3} parent=1 // pred_fallthru
      _
    // Predicated region
    $region22: #{duelnet_forward.3} parent=1 // pred_check
      _
    $region23: #{duelnet_forward.3} parent=1 // pred_check_branch
      %26 = sbr.rel (0) target = $region25
    $region24: #{duelnet_forward.3} parent=1 // pred_region
      _
    $region25: #{duelnet_forward.3} parent=1 // pred_fallthru
      _
    // Predicated region
    $region26: #{duelnet_forward.3} parent=1 // pred_check
      _
    $region27: #{duelnet_forward.3} parent=1 // pred_check_branch
      %28 = sbr.rel (0) target = $region29
    $region28: #{duelnet_forward.3} parent=1 // pred_region
      _
    $region29: #{duelnet_forward.3} parent=1 // pred_fallthru
      _
    // Predicated region
    $region30: #{duelnet_forward.3} parent=1 // pred_check
      _
    $region31: #{duelnet_forward.3} parent=1 // pred_check_branch
      %30 = sbr.rel (0) target = $region33
    $region32: #{duelnet_forward.3} parent=1 // pred_region
      _
    $region33: #{duelnet_forward.3} parent=1 // pred_fallthru
      _
    // Predicated region
    $region34: #{duelnet_forward.3} parent=1 // pred_check
      _
    $region35: #{duelnet_forward.3} parent=1 // pred_check_branch
      %32 = sbr.rel (0) target = $region37
    $region36: #{duelnet_forward.3} parent=1 // pred_region
      _
    $region37: #{duelnet_forward.3} parent=1 // pred_fallthru
      _
    %v33 = vld [vmem:[%s1] sm:$0xff]
    %v34 = vld [vmem:[%s1 + $0x8] sm:$0xff]
    %v35 = vld [vmem:[%s1 + $0x10] sm:$0xff]
    %v36 = vld [vmem:[%s1 + $0x18] sm:$0xff]
    %v37 = vld [vmem:[%s1 + $0x20] sm:$0xff]
    %v38 = vld [vmem:[%s1 + $0x28] sm:$0xff]
    %v39 = vld [vmem:[%s1 + $0x30] sm:$0xff]
    %v40 = vld [vmem:[%s1 + $0x38] sm:$0xff]
    %v41 = vld [vmem:[%s1 + $0x40] sm:$0xff]
    %v42 = vld [vmem:[%s1 + $0x48] sm:$0xff]
    %v43 = vld [vmem:[%s1 + $0x50] sm:$0xff]
    %v44 = vld [vmem:[%s1 + $0x58] sm:$0xff]
    %v45 = vld [vmem:[%s1 + $0x60] sm:$0xff]
    %v46 = vld [vmem:[%s1 + $0x68] sm:$0xff]
    %v47 = vld [vmem:[%s1 + $0x70] sm:$0xff]
    %v48 = vld [vmem:[%s1 + $0x78] sm:$0xff]
    %v49 = vld [vmem:[%s1 + $0x80] sm:$0xff]
    %v50 = vld [vmem:[%s1 + $0x88] sm:$0xff]
    %v51 = vld [vmem:[%s1 + $0x90] sm:$0xff]
    %v52 = vld [vmem:[%s1 + $0x98] sm:$0xff]
    %v53 = vld [vmem:[%s1 + $0xa0] sm:$0xff]
    %v54 = vld [vmem:[%s1 + $0xa8] sm:$0xff]
    %v55 = vld [vmem:[%s1 + $0xb0] sm:$0xff]
    %v56 = vld [vmem:[%s1 + $0xb8] sm:$0xff]
    %v57 = vld [vmem:[%s1 + $0xc0] sm:$0xff]
    %v58 = vld [vmem:[%s1 + $0xc8] sm:$0xff]
    %v59 = vld [vmem:[%s1 + $0xd0] sm:$0xff]
    %v60 = vld [vmem:[%s1 + $0xd8] sm:$0xff]
    %v61 = vld [vmem:[%s1 + $0xe0] sm:$0xff]
    %v62 = vld [vmem:[%s1 + $0xe8] sm:$0xff]
    %v63 = vld [vmem:[%s1 + $0xf0] sm:$0xff]
    %v64 = vld [vmem:[%s1 + $0xf8] sm:$0xff]
    %v65 = vld [vmem:[%s1 + $0x100] sm:$0xff]
    %v66 = vld [vmem:[%s1 + $0x108] sm:$0xff]
    %v67 = vld [vmem:[%s1 + $0x110] sm:$0xff]
    %v68 = vld [vmem:[%s1 + $0x118] sm:$0xff]
    %v69 = vld [vmem:[%s1 + $0x120] sm:$0xff]
    %v70 = vld [vmem:[%s1 + $0x128] sm:$0xff]
    %v71 = vld [vmem:[%s1 + $0x130] sm:$0xff]
    %v72 = vld [vmem:[%s1 + $0x138] sm:$0xff]
    %v73 = vld [vmem:[%s1 + $0x140] sm:$0xff]
    %v74 = vld [vmem:[%s1 + $0x148] sm:$0xff]
    %v75 = vld [vmem:[%s1 + $0x150] sm:$0xff]
    %v76 = vld [vmem:[%s1 + $0x158] sm:$0xff]
    %v77 = vld [vmem:[%s1 + $0x160] sm:$0xff]
    %v78 = vld [vmem:[%s1 + $0x168] sm:$0xff]
    %v79 = vld [vmem:[%s1 + $0x170] sm:$0xff]
    %v80 = vld [vmem:[%s1 + $0x178] sm:$0xff]
    %v81 = vld [vmem:[%s1 + $0x180] sm:$0xff]
    %v82 = vld [vmem:[%s1 + $0x188] sm:$0xff]
    %v83 = vld [vmem:[%s1 + $0x190] sm:$0xff]
    %v84 = vld [vmem:[%s1 + $0x198] sm:$0xff]
    %v85 = vld [vmem:[%s1 + $0x1a0] sm:$0xff]
    %v86 = vld [vmem:[%s1 + $0x1a8] sm:$0xff]
    %v87 = vld [vmem:[%s1 + $0x1b0] sm:$0xff]
    %v88 = vld [vmem:[%s1 + $0x1b8] sm:$0xff]
    %v89 = vld [vmem:[%s1 + $0x1c0] sm:$0xff]
    %v90 = vld [vmem:[%s1 + $0x1c8] sm:$0xff]
    %v91 = vld [vmem:[%s1 + $0x1d0] sm:$0xff]
    %v92 = vld [vmem:[%s1 + $0x1d8] sm:$0xff]
    %v93 = vld [vmem:[%s1 + $0x1e0] sm:$0xff]
    %v94 = vld [vmem:[%s1 + $0x1e8] sm:$0xff]
    %v95 = vld [vmem:[%s1 + $0x1f0] sm:$0xff]
    %v96 = vld [vmem:[%s1 + $0x1f8] sm:$0xff]
    %v97 = vld [vmem:[%s2] sm:$0x1]
    %v98 = vld [vmem:[%s0] sm:$0xff]
    %v100 = vperm.slane %v97, 0
    %103 = vst [vmem:[#allocation1] ss:$4 sm:$0xff] %v98
    %v104 = vld.sshfl [vmem:[#allocation1] sm:$0xff pattern:$0x73625140]
    %v105 = vld.sshfl [vmem:[#allocation1 + $0x8] sm:$0xff pattern:$0x73625140]
    %v106 = vld.sshfl [vmem:[#allocation1 + $0x10] sm:$0xff pattern:$0x73625140]
    %v107 = vld.sshfl [vmem:[#allocation1 + $0x18] sm:$0xff pattern:$0x73625140]
    %112 = vmatpush.msra.mxu0 %v48
    %113 = vmatpush.msra.mxu0 %v47
    %114 = vmatpush.msra.mxu0 %v46
    %115 = vmatpush.msra.mxu0 %v45
    %116 = vmatpush.msra.mxu0 %v44
    %117 = vmatpush.msra.mxu0 %v43
    %118 = vmatpush.msra.mxu0 %v42
    %119 = vmatpush.msra.mxu0 %v41
    %120 = vmatpush.msra.mxu0 %v40
    %121 = vmatpush.msra.mxu0 %v39
    %122 = vmatpush.msra.mxu0 %v38
    %123 = vmatpush.msra.mxu0 %v37
    %124 = vmatpush.msra.mxu0 %v36
    %125 = vmatpush.msra.mxu0 %v35
    %126 = vmatpush.msra.mxu0 %v34
    %127 = vmatpush.msra.mxu0 %v33
    %128 = vmatmul.f32.gmra.mxu0 %v104
    %v129 = vpop.f32.mrf.mxu0
    %v130 = vadd.f32 %v100, %v129
    %131 = vdwg.mxu0
    %132 = vmatpush.msra.mxu0 %v64
    %133 = vmatpush.msra.mxu0 %v63
    %134 = vmatpush.msra.mxu0 %v62
    %135 = vmatpush.msra.mxu0 %v61
    %136 = vmatpush.msra.mxu0 %v60
    %137 = vmatpush.msra.mxu0 %v59
    %138 = vmatpush.msra.mxu0 %v58
    %139 = vmatpush.msra.mxu0 %v57
    %140 = vmatpush.msra.mxu0 %v56
    %141 = vmatpush.msra.mxu0 %v55
    %142 = vmatpush.msra.mxu0 %v54
    %143 = vmatpush.msra.mxu0 %v53
    %144 = vmatpush.msra.mxu0 %v52
    %145 = vmatpush.msra.mxu0 %v51
    %146 = vmatpush.msra.mxu0 %v50
    %147 = vmatpush.msra.mxu0 %v49
    %148 = vmatmul.f32.gmra.mxu0 %v105
    %v149 = vpop.f32.mrf.mxu0
    %v150 = vadd.f32 %v130, %v149
    %151 = vdwg.mxu0
    %152 = vmatpush.msra.mxu0 %v80
    %153 = vmatpush.msra.mxu0 %v79
    %154 = vmatpush.msra.mxu0 %v78
    %155 = vmatpush.msra.mxu0 %v77
    %156 = vmatpush.msra.mxu0 %v76
    %157 = vmatpush.msra.mxu0 %v75
    %158 = vmatpush.msra.mxu0 %v74
    %159 = vmatpush.msra.mxu0 %v73
    %160 = vmatpush.msra.mxu0 %v72
    %161 = vmatpush.msra.mxu0 %v71
    %162 = vmatpush.msra.mxu0 %v70
    %163 = vmatpush.msra.mxu0 %v69
    %164 = vmatpush.msra.mxu0 %v68
    %165 = vmatpush.msra.mxu0 %v67
    %166 = vmatpush.msra.mxu0 %v66
    %167 = vmatpush.msra.mxu0 %v65
    %168 = vmatmul.f32.gmra.mxu0 %v106
    %v169 = vpop.f32.mrf.mxu0
    %v170 = vadd.f32 %v150, %v169
    %171 = vdwg.mxu0
    %172 = vmatpush.msra.mxu0 %v96
    %173 = vmatpush.msra.mxu0 %v95
    %174 = vmatpush.msra.mxu0 %v94
    %175 = vmatpush.msra.mxu0 %v93
    %176 = vmatpush.msra.mxu0 %v92
    %177 = vmatpush.msra.mxu0 %v91
    %178 = vmatpush.msra.mxu0 %v90
    %179 = vmatpush.msra.mxu0 %v89
    %180 = vmatpush.msra.mxu0 %v88
    %181 = vmatpush.msra.mxu0 %v87
    %182 = vmatpush.msra.mxu0 %v86
    %183 = vmatpush.msra.mxu0 %v85
    %184 = vmatpush.msra.mxu0 %v84
    %185 = vmatpush.msra.mxu0 %v83
    %186 = vmatpush.msra.mxu0 %v82
    %187 = vmatpush.msra.mxu0 %v81
    %188 = vmatmul.f32.gmra.mxu0 %v107
    %v189 = vpop.f32.mrf.mxu0
    %v190 = vadd.f32 %v170, %v189
    %191 = vdwg.mxu0
    %v192 = vmax.f32 %v190, 0.0
    %v193 = vld [vmem:[%s3] sm:$0xff]
    %v194 = vld [vmem:[%s3 + $0x8] sm:$0xff]
    %v195 = vld [vmem:[%s3 + $0x10] sm:$0xff]
    %v196 = vld [vmem:[%s3 + $0x18] sm:$0xff]
    %v197 = vld [vmem:[%s3 + $0x20] sm:$0xff]
    %v198 = vld [vmem:[%s3 + $0x28] sm:$0xff]
    %v199 = vld [vmem:[%s3 + $0x30] sm:$0xff]
    %v200 = vld [vmem:[%s3 + $0x38] sm:$0xff]
    %s201 = scalar_lea.vmem %s0, 8
    %v202 = vld [vmem:[%s201] sm:$0xff]
    %204 = vst [vmem:[#allocation1] ss:$4 sm:$0xff] %v202
    %v205 = vld.sshfl [vmem:[#allocation1] sm:$0xff pattern:$0x73625140]
    %v206 = vld.sshfl [vmem:[#allocation1 + $0x8] sm:$0xff pattern:$0x73625140]
    %v207 = vld.sshfl [vmem:[#allocation1 + $0x10] sm:$0xff pattern:$0x73625140]
    %v208 = vld.sshfl [vmem:[#allocation1 + $0x18] sm:$0xff pattern:$0x73625140]
    %213 = vmatpush.msra.mxu0 %v48
    %214 = vmatpush.msra.mxu0 %v47
    %215 = vmatpush.msra.mxu0 %v46
    %216 = vmatpush.msra.mxu0 %v45
    %217 = vmatpush.msra.mxu0 %v44
    %218 = vmatpush.msra.mxu0 %v43
    %219 = vmatpush.msra.mxu0 %v42
    %220 = vmatpush.msra.mxu0 %v41
    %221 = vmatpush.msra.mxu0 %v40
    %222 = vmatpush.msra.mxu0 %v39
    %223 = vmatpush.msra.mxu0 %v38
    %224 = vmatpush.msra.mxu0 %v37
    %225 = vmatpush.msra.mxu0 %v36
    %226 = vmatpush.msra.mxu0 %v35
    %227 = vmatpush.msra.mxu0 %v34
    %228 = vmatpush.msra.mxu0 %v33
    %229 = vmatmul.f32.gmra.mxu0 %v205
    %v230 = vpop.f32.mrf.mxu0
    %v231 = vadd.f32 %v100, %v230
    %232 = vdwg.mxu0
    %233 = vmatpush.msra.mxu0 %v64
    %234 = vmatpush.msra.mxu0 %v63
    %235 = vmatpush.msra.mxu0 %v62
    %236 = vmatpush.msra.mxu0 %v61
    %237 = vmatpush.msra.mxu0 %v60
    %238 = vmatpush.msra.mxu0 %v59
    %239 = vmatpush.msra.mxu0 %v58
    %240 = vmatpush.msra.mxu0 %v57
    %241 = vmatpush.msra.mxu0 %v56
    %242 = vmatpush.msra.mxu0 %v55
    %243 = vmatpush.msra.mxu0 %v54
    %244 = vmatpush.msra.mxu0 %v53
    %245 = vmatpush.msra.mxu0 %v52
    %246 = vmatpush.msra.mxu0 %v51
    %247 = vmatpush.msra.mxu0 %v50
    %248 = vmatpush.msra.mxu0 %v49
    %249 = vmatmul.f32.gmra.mxu0 %v206
    %v250 = vpop.f32.mrf.mxu0
    %v251 = vadd.f32 %v231, %v250
    %252 = vdwg.mxu0
    %253 = vmatpush.msra.mxu0 %v80
    %254 = vmatpush.msra.mxu0 %v79
    %255 = vmatpush.msra.mxu0 %v78
    %256 = vmatpush.msra.mxu0 %v77
    %257 = vmatpush.msra.mxu0 %v76
    %258 = vmatpush.msra.mxu0 %v75
    %259 = vmatpush.msra.mxu0 %v74
    %260 = vmatpush.msra.mxu0 %v73
    %261 = vmatpush.msra.mxu0 %v72
    %262 = vmatpush.msra.mxu0 %v71
    %263 = vmatpush.msra.mxu0 %v70
    %264 = vmatpush.msra.mxu0 %v69
    %265 = vmatpush.msra.mxu0 %v68
    %266 = vmatpush.msra.mxu0 %v67
    %267 = vmatpush.msra.mxu0 %v66
    %268 = vmatpush.msra.mxu0 %v65
    %269 = vmatmul.f32.gmra.mxu0 %v207
    %v270 = vpop.f32.mrf.mxu0
    %v271 = vadd.f32 %v251, %v270
    %272 = vdwg.mxu0
    %273 = vmatpush.msra.mxu0 %v96
    %274 = vmatpush.msra.mxu0 %v95
    %275 = vmatpush.msra.mxu0 %v94
    %276 = vmatpush.msra.mxu0 %v93
    %277 = vmatpush.msra.mxu0 %v92
    %278 = vmatpush.msra.mxu0 %v91
    %279 = vmatpush.msra.mxu0 %v90
    %280 = vmatpush.msra.mxu0 %v89
    %281 = vmatpush.msra.mxu0 %v88
    %282 = vmatpush.msra.mxu0 %v87
    %283 = vmatpush.msra.mxu0 %v86
    %284 = vmatpush.msra.mxu0 %v85
    %285 = vmatpush.msra.mxu0 %v84
    %286 = vmatpush.msra.mxu0 %v83
    %287 = vmatpush.msra.mxu0 %v82
    %288 = vmatpush.msra.mxu0 %v81
    %289 = vmatmul.f32.gmra.mxu0 %v208
    %v290 = vpop.f32.mrf.mxu0
    %v291 = vadd.f32 %v271, %v290
    %292 = vdwg.mxu0
    %v293 = vmax.f32 %v291, 0.0
    %v294 = vld [vmem:[%s3 + $0x40] sm:$0xff]
    %v295 = vld [vmem:[%s3 + $0x48] sm:$0xff]
    %v296 = vld [vmem:[%s3 + $0x50] sm:$0xff]
    %v297 = vld [vmem:[%s3 + $0x58] sm:$0xff]
    %v298 = vld [vmem:[%s3 + $0x60] sm:$0xff]
    %v299 = vld [vmem:[%s3 + $0x68] sm:$0xff]
    %v300 = vld [vmem:[%s3 + $0x70] sm:$0xff]
    %v301 = vld [vmem:[%s3 + $0x78] sm:$0xff]
    %vm302 = vcmask 523264
    %v304 = vsel %vm302, %v293, 0
    %306 = vmatpush.msra.mxu0 0.0
    %307 = vmatpush.msra.mxu0 0.0
    %308 = vmatpush.msra.mxu0 0.0
    %309 = vmatpush.msra.mxu0 0.0
    %310 = vmatpush.msra.mxu0 0.0
    %311 = vmatpush.msra.mxu0 0.0
    %312 = vmatpush.msra.mxu0 0.0
    %313 = vmatpush.msra.mxu0 0.0
    %314 = vmatpush.msra.mxu0 %v301
    %315 = vmatpush.msra.mxu0 %v300
    %316 = vmatpush.msra.mxu0 %v299
    %317 = vmatpush.msra.mxu0 %v298
    %318 = vmatpush.msra.mxu0 %v297
    %319 = vmatpush.msra.mxu0 %v296
    %320 = vmatpush.msra.mxu0 %v295
    %321 = vmatpush.msra.mxu0 %v294
    %322 = vmatmul.f32.gmra.mxu0 %v304
    %v323 = vpop.f32.mrf.mxu0
    %v324 = vadd.f32 0.0, %v323
    %325 = vdwg.mxu0
    %v327 = vsel %vm302, %v192, 0
    %329 = vmatpush.msra.mxu0 0.0
    %330 = vmatpush.msra.mxu0 0.0
    %331 = vmatpush.msra.mxu0 0.0
    %332 = vmatpush.msra.mxu0 0.0
    %333 = vmatpush.msra.mxu0 0.0
    %334 = vmatpush.msra.mxu0 0.0
    %335 = vmatpush.msra.mxu0 0.0
    %336 = vmatpush.msra.mxu0 0.0
    %337 = vmatpush.msra.mxu0 %v200
    %338 = vmatpush.msra.mxu0 %v199
    %339 = vmatpush.msra.mxu0 %v198
    %340 = vmatpush.msra.mxu0 %v197
    %341 = vmatpush.msra.mxu0 %v196
    %342 = vmatpush.msra.mxu0 %v195
    %343 = vmatpush.msra.mxu0 %v194
    %344 = vmatpush.msra.mxu0 %v193
    %345 = vmatmul.f32.gmra.mxu0 %v327
    %v346 = vpop.f32.mrf.mxu0
    %v347 = vadd.f32 %v324, %v346
    %348 = vdwg.mxu0
    %s349 = scalar_lea.vmem %s0, 16
    %v350 = vld [vmem:[%s349] sm:$0xff]
    %352 = vst [vmem:[#allocation1] ss:$4 sm:$0xff] %v350
    %v353 = vld.sshfl [vmem:[#allocation1] sm:$0xff pattern:$0x73625140]
    %v354 = vld.sshfl [vmem:[#allocation1 + $0x8] sm:$0xff pattern:$0x73625140]
    %v355 = vld.sshfl [vmem:[#allocation1 + $0x10] sm:$0xff pattern:$0x73625140]
    %v356 = vld.sshfl [vmem:[#allocation1 + $0x18] sm:$0xff pattern:$0x73625140]
    %361 = vmatpush.msra.mxu0 %v48
    %362 = vmatpush.msra.mxu0 %v47
    %363 = vmatpush.msra.mxu0 %v46
    %364 = vmatpush.msra.mxu0 %v45
    %365 = vmatpush.msra.mxu0 %v44
    %366 = vmatpush.msra.mxu0 %v43
    %367 = vmatpush.msra.mxu0 %v42
    %368 = vmatpush.msra.mxu0 %v41
    %369 = vmatpush.msra.mxu0 %v40
    %370 = vmatpush.msra.mxu0 %v39
    %371 = vmatpush.msra.mxu0 %v38
    %372 = vmatpush.msra.mxu0 %v37
    %373 = vmatpush.msra.mxu0 %v36
    %374 = vmatpush.msra.mxu0 %v35
    %375 = vmatpush.msra.mxu0 %v34
    %376 = vmatpush.msra.mxu0 %v33
    %377 = vmatmul.f32.gmra.mxu0 %v353
    %v378 = vpop.f32.mrf.mxu0
    %v379 = vadd.f32 %v100, %v378
    %380 = vdwg.mxu0
    %381 = vmatpush.msra.mxu0 %v64
    %382 = vmatpush.msra.mxu0 %v63
    %383 = vmatpush.msra.mxu0 %v62
    %384 = vmatpush.msra.mxu0 %v61
    %385 = vmatpush.msra.mxu0 %v60
    %386 = vmatpush.msra.mxu0 %v59
    %387 = vmatpush.msra.mxu0 %v58
    %388 = vmatpush.msra.mxu0 %v57
    %389 = vmatpush.msra.mxu0 %v56
    %390 = vmatpush.msra.mxu0 %v55
    %391 = vmatpush.msra.mxu0 %v54
    %392 = vmatpush.msra.mxu0 %v53
    %393 = vmatpush.msra.mxu0 %v52
    %394 = vmatpush.msra.mxu0 %v51
    %395 = vmatpush.msra.mxu0 %v50
    %396 = vmatpush.msra.mxu0 %v49
    %397 = vmatmul.f32.gmra.mxu0 %v354
    %v398 = vpop.f32.mrf.mxu0
    %v399 = vadd.f32 %v379, %v398
    %400 = vdwg.mxu0
    %401 = vmatpush.msra.mxu0 %v80
    %402 = vmatpush.msra.mxu0 %v79
    %403 = vmatpush.msra.mxu0 %v78
    %404 = vmatpush.msra.mxu0 %v77
    %405 = vmatpush.msra.mxu0 %v76
    %406 = vmatpush.msra.mxu0 %v75
    %407 = vmatpush.msra.mxu0 %v74
    %408 = vmatpush.msra.mxu0 %v73
    %409 = vmatpush.msra.mxu0 %v72
    %410 = vmatpush.msra.mxu0 %v71
    %411 = vmatpush.msra.mxu0 %v70
    %412 = vmatpush.msra.mxu0 %v69
    %413 = vmatpush.msra.mxu0 %v68
    %414 = vmatpush.msra.mxu0 %v67
    %415 = vmatpush.msra.mxu0 %v66
    %416 = vmatpush.msra.mxu0 %v65
    %417 = vmatmul.f32.gmra.mxu0 %v355
    %v418 = vpop.f32.mrf.mxu0
    %v419 = vadd.f32 %v399, %v418
    %420 = vdwg.mxu0
    %421 = vmatpush.msra.mxu0 %v96
    %422 = vmatpush.msra.mxu0 %v95
    %423 = vmatpush.msra.mxu0 %v94
    %424 = vmatpush.msra.mxu0 %v93
    %425 = vmatpush.msra.mxu0 %v92
    %426 = vmatpush.msra.mxu0 %v91
    %427 = vmatpush.msra.mxu0 %v90
    %428 = vmatpush.msra.mxu0 %v89
    %429 = vmatpush.msra.mxu0 %v88
    %430 = vmatpush.msra.mxu0 %v87
    %431 = vmatpush.msra.mxu0 %v86
    %432 = vmatpush.msra.mxu0 %v85
    %433 = vmatpush.msra.mxu0 %v84
    %434 = vmatpush.msra.mxu0 %v83
    %435 = vmatpush.msra.mxu0 %v82
    %436 = vmatpush.msra.mxu0 %v81
    %437 = vmatmul.f32.gmra.mxu0 %v356
    %v438 = vpop.f32.mrf.mxu0
    %v439 = vadd.f32 %v419, %v438
    %440 = vdwg.mxu0
    %v441 = vmax.f32 %v439, 0.0
    %v442 = vld [vmem:[%s3 + $0x80] sm:$0xff]
    %v443 = vld [vmem:[%s3 + $0x88] sm:$0xff]
    %v444 = vld [vmem:[%s3 + $0x90] sm:$0xff]
    %v445 = vld [vmem:[%s3 + $0x98] sm:$0xff]
    %v446 = vld [vmem:[%s3 + $0xa0] sm:$0xff]
    %v447 = vld [vmem:[%s3 + $0xa8] sm:$0xff]
    %v448 = vld [vmem:[%s3 + $0xb0] sm:$0xff]
    %v449 = vld [vmem:[%s3 + $0xb8] sm:$0xff]
    %v451 = vsel %vm302, %v441, 0
    %453 = vmatpush.msra.mxu0 0.0
    %454 = vmatpush.msra.mxu0 0.0
    %455 = vmatpush.msra.mxu0 0.0
    %456 = vmatpush.msra.mxu0 0.0
    %457 = vmatpush.msra.mxu0 0.0
    %458 = vmatpush.msra.mxu0 0.0
    %459 = vmatpush.msra.mxu0 0.0
    %460 = vmatpush.msra.mxu0 0.0
    %461 = vmatpush.msra.mxu0 %v449
    %462 = vmatpush.msra.mxu0 %v448
    %463 = vmatpush.msra.mxu0 %v447
    %464 = vmatpush.msra.mxu0 %v446
    %465 = vmatpush.msra.mxu0 %v445
    %466 = vmatpush.msra.mxu0 %v444
    %467 = vmatpush.msra.mxu0 %v443
    %468 = vmatpush.msra.mxu0 %v442
    %469 = vmatmul.f32.gmra.mxu0 %v451
    %v470 = vpop.f32.mrf.mxu0
    %v471 = vadd.f32 0.0, %v470
    %472 = vdwg.mxu0
    %v473 = vadd.f32 %v347, %v471
    %s474 = scalar_lea.vmem %s0, 24
    %v475 = vld [vmem:[%s474] sm:$0xff]
    %477 = vst [vmem:[#allocation1] ss:$4 sm:$0xff] %v475
    %v478 = vld.sshfl [vmem:[#allocation1] sm:$0xff pattern:$0x73625140]
    %v479 = vld.sshfl [vmem:[#allocation1 + $0x8] sm:$0xff pattern:$0x73625140]
    %v480 = vld.sshfl [vmem:[#allocation1 + $0x10] sm:$0xff pattern:$0x73625140]
    %v481 = vld.sshfl [vmem:[#allocation1 + $0x18] sm:$0xff pattern:$0x73625140]
    %486 = vmatpush.msra.mxu0 %v48
    %487 = vmatpush.msra.mxu0 %v47
    %488 = vmatpush.msra.mxu0 %v46
    %489 = vmatpush.msra.mxu0 %v45
    %490 = vmatpush.msra.mxu0 %v44
    %491 = vmatpush.msra.mxu0 %v43
    %492 = vmatpush.msra.mxu0 %v42
    %493 = vmatpush.msra.mxu0 %v41
    %494 = vmatpush.msra.mxu0 %v40
    %495 = vmatpush.msra.mxu0 %v39
    %496 = vmatpush.msra.mxu0 %v38
    %497 = vmatpush.msra.mxu0 %v37
    %498 = vmatpush.msra.mxu0 %v36
    %499 = vmatpush.msra.mxu0 %v35
    %500 = vmatpush.msra.mxu0 %v34
    %501 = vmatpush.msra.mxu0 %v33
    %502 = vmatmul.f32.gmra.mxu0 %v478
    %v503 = vpop.f32.mrf.mxu0
    %v504 = vadd.f32 %v100, %v503
    %505 = vdwg.mxu0
    %506 = vmatpush.msra.mxu0 %v64
    %507 = vmatpush.msra.mxu0 %v63
    %508 = vmatpush.msra.mxu0 %v62
    %509 = vmatpush.msra.mxu0 %v61
    %510 = vmatpush.msra.mxu0 %v60
    %511 = vmatpush.msra.mxu0 %v59
    %512 = vmatpush.msra.mxu0 %v58
    %513 = vmatpush.msra.mxu0 %v57
    %514 = vmatpush.msra.mxu0 %v56
    %515 = vmatpush.msra.mxu0 %v55
    %516 = vmatpush.msra.mxu0 %v54
    %517 = vmatpush.msra.mxu0 %v53
    %518 = vmatpush.msra.mxu0 %v52
    %519 = vmatpush.msra.mxu0 %v51
    %520 = vmatpush.msra.mxu0 %v50
    %521 = vmatpush.msra.mxu0 %v49
    %522 = vmatmul.f32.gmra.mxu0 %v479
    %v523 = vpop.f32.mrf.mxu0
    %v524 = vadd.f32 %v504, %v523
    %525 = vdwg.mxu0
    %526 = vmatpush.msra.mxu0 %v80
    %527 = vmatpush.msra.mxu0 %v79
    %528 = vmatpush.msra.mxu0 %v78
    %529 = vmatpush.msra.mxu0 %v77
    %530 = vmatpush.msra.mxu0 %v76
    %531 = vmatpush.msra.mxu0 %v75
    %532 = vmatpush.msra.mxu0 %v74
    %533 = vmatpush.msra.mxu0 %v73
    %534 = vmatpush.msra.mxu0 %v72
    %535 = vmatpush.msra.mxu0 %v71
    %536 = vmatpush.msra.mxu0 %v70
    %537 = vmatpush.msra.mxu0 %v69
    %538 = vmatpush.msra.mxu0 %v68
    %539 = vmatpush.msra.mxu0 %v67
    %540 = vmatpush.msra.mxu0 %v66
    %541 = vmatpush.msra.mxu0 %v65
    %542 = vmatmul.f32.gmra.mxu0 %v480
    %v543 = vpop.f32.mrf.mxu0
    %v544 = vadd.f32 %v524, %v543
    %545 = vdwg.mxu0
    %546 = vmatpush.msra.mxu0 %v96
    %547 = vmatpush.msra.mxu0 %v95
    %548 = vmatpush.msra.mxu0 %v94
    %549 = vmatpush.msra.mxu0 %v93
    %550 = vmatpush.msra.mxu0 %v92
    %551 = vmatpush.msra.mxu0 %v91
    %552 = vmatpush.msra.mxu0 %v90
    %553 = vmatpush.msra.mxu0 %v89
    %554 = vmatpush.msra.mxu0 %v88
    %555 = vmatpush.msra.mxu0 %v87
    %556 = vmatpush.msra.mxu0 %v86
    %557 = vmatpush.msra.mxu0 %v85
    %558 = vmatpush.msra.mxu0 %v84
    %559 = vmatpush.msra.mxu0 %v83
    %560 = vmatpush.msra.mxu0 %v82
    %561 = vmatpush.msra.mxu0 %v81
    %562 = vmatmul.f32.gmra.mxu0 %v481
    %v563 = vpop.f32.mrf.mxu0
    %v564 = vadd.f32 %v544, %v563
    %565 = vdwg.mxu0
    %v566 = vmax.f32 %v564, 0.0
    %v567 = vld [vmem:[%s3 + $0xc0] sm:$0xff]
    %v568 = vld [vmem:[%s3 + $0xc8] sm:$0xff]
    %v569 = vld [vmem:[%s3 + $0xd0] sm:$0xff]
    %v570 = vld [vmem:[%s3 + $0xd8] sm:$0xff]
    %v571 = vld [vmem:[%s3 + $0xe0] sm:$0xff]
    %v572 = vld [vmem:[%s3 + $0xe8] sm:$0xff]
    %v573 = vld [vmem:[%s3 + $0xf0] sm:$0xff]
    %v574 = vld [vmem:[%s3 + $0xf8] sm:$0xff]
    %v576 = vsel %vm302, %v566, 0
    %578 = vmatpush.msra.mxu0 0.0
    %579 = vmatpush.msra.mxu0 0.0
    %580 = vmatpush.msra.mxu0 0.0
    %581 = vmatpush.msra.mxu0 0.0
    %582 = vmatpush.msra.mxu0 0.0
    %583 = vmatpush.msra.mxu0 0.0
    %584 = vmatpush.msra.mxu0 0.0
    %585 = vmatpush.msra.mxu0 0.0
    %586 = vmatpush.msra.mxu0 %v574
    %587 = vmatpush.msra.mxu0 %v573
    %588 = vmatpush.msra.mxu0 %v572
    %589 = vmatpush.msra.mxu0 %v571
    %590 = vmatpush.msra.mxu0 %v570
    %591 = vmatpush.msra.mxu0 %v569
    %592 = vmatpush.msra.mxu0 %v568
    %593 = vmatpush.msra.mxu0 %v567
    %594 = vmatmul.f32.gmra.mxu0 %v576
    %v595 = vpop.f32.mrf.mxu0
    %v596 = vadd.f32 0.0, %v595
    %597 = vdwg.mxu0
    %v598 = vadd.f32 %v473, %v596
    %s599 = scalar_lea.vmem %s0, 32
    %v600 = vld [vmem:[%s599] sm:$0xff]
    %602 = vst [vmem:[#allocation1] ss:$4 sm:$0xff] %v600
    %v603 = vld.sshfl [vmem:[#allocation1] sm:$0xff pattern:$0x73625140]
    %v604 = vld.sshfl [vmem:[#allocation1 + $0x8] sm:$0xff pattern:$0x73625140]
    %v605 = vld.sshfl [vmem:[#allocation1 + $0x10] sm:$0xff pattern:$0x73625140]
    %v606 = vld.sshfl [vmem:[#allocation1 + $0x18] sm:$0xff pattern:$0x73625140]
    %611 = vmatpush.msra.mxu0 %v48
    %612 = vmatpush.msra.mxu0 %v47
    %613 = vmatpush.msra.mxu0 %v46
    %614 = vmatpush.msra.mxu0 %v45
    %615 = vmatpush.msra.mxu0 %v44
    %616 = vmatpush.msra.mxu0 %v43
    %617 = vmatpush.msra.mxu0 %v42
    %618 = vmatpush.msra.mxu0 %v41
    %619 = vmatpush.msra.mxu0 %v40
    %620 = vmatpush.msra.mxu0 %v39
    %621 = vmatpush.msra.mxu0 %v38
    %622 = vmatpush.msra.mxu0 %v37
    %623 = vmatpush.msra.mxu0 %v36
    %624 = vmatpush.msra.mxu0 %v35
    %625 = vmatpush.msra.mxu0 %v34
    %626 = vmatpush.msra.mxu0 %v33
    %627 = vmatmul.f32.gmra.mxu0 %v603
    %v628 = vpop.f32.mrf.mxu0
    %v629 = vadd.f32 %v100, %v628
    %630 = vdwg.mxu0
    %631 = vmatpush.msra.mxu0 %v64
    %632 = vmatpush.msra.mxu0 %v63
    %633 = vmatpush.msra.mxu0 %v62
    %634 = vmatpush.msra.mxu0 %v61
    %635 = vmatpush.msra.mxu0 %v60
    %636 = vmatpush.msra.mxu0 %v59
    %637 = vmatpush.msra.mxu0 %v58
    %638 = vmatpush.msra.mxu0 %v57
    %639 = vmatpush.msra.mxu0 %v56
    %640 = vmatpush.msra.mxu0 %v55
    %641 = vmatpush.msra.mxu0 %v54
    %642 = vmatpush.msra.mxu0 %v53
    %643 = vmatpush.msra.mxu0 %v52
    %644 = vmatpush.msra.mxu0 %v51
    %645 = vmatpush.msra.mxu0 %v50
    %646 = vmatpush.msra.mxu0 %v49
    %647 = vmatmul.f32.gmra.mxu0 %v604
    %v648 = vpop.f32.mrf.mxu0
    %v649 = vadd.f32 %v629, %v648
    %650 = vdwg.mxu0
    %651 = vmatpush.msra.mxu0 %v80
    %652 = vmatpush.msra.mxu0 %v79
    %653 = vmatpush.msra.mxu0 %v78
    %654 = vmatpush.msra.mxu0 %v77
    %655 = vmatpush.msra.mxu0 %v76
    %656 = vmatpush.msra.mxu0 %v75
    %657 = vmatpush.msra.mxu0 %v74
    %658 = vmatpush.msra.mxu0 %v73
    %659 = vmatpush.msra.mxu0 %v72
    %660 = vmatpush.msra.mxu0 %v71
    %661 = vmatpush.msra.mxu0 %v70
    %662 = vmatpush.msra.mxu0 %v69
    %663 = vmatpush.msra.mxu0 %v68
    %664 = vmatpush.msra.mxu0 %v67
    %665 = vmatpush.msra.mxu0 %v66
    %666 = vmatpush.msra.mxu0 %v65
    %667 = vmatmul.f32.gmra.mxu0 %v605
    %v668 = vpop.f32.mrf.mxu0
    %v669 = vadd.f32 %v649, %v668
    %670 = vdwg.mxu0
    %671 = vmatpush.msra.mxu0 %v96
    %672 = vmatpush.msra.mxu0 %v95
    %673 = vmatpush.msra.mxu0 %v94
    %674 = vmatpush.msra.mxu0 %v93
    %675 = vmatpush.msra.mxu0 %v92
    %676 = vmatpush.msra.mxu0 %v91
    %677 = vmatpush.msra.mxu0 %v90
    %678 = vmatpush.msra.mxu0 %v89
    %679 = vmatpush.msra.mxu0 %v88
    %680 = vmatpush.msra.mxu0 %v87
    %681 = vmatpush.msra.mxu0 %v86
    %682 = vmatpush.msra.mxu0 %v85
    %683 = vmatpush.msra.mxu0 %v84
    %684 = vmatpush.msra.mxu0 %v83
    %685 = vmatpush.msra.mxu0 %v82
    %686 = vmatpush.msra.mxu0 %v81
    %687 = vmatmul.f32.gmra.mxu0 %v606
    %v688 = vpop.f32.mrf.mxu0
    %v689 = vadd.f32 %v669, %v688
    %690 = vdwg.mxu0
    %v691 = vmax.f32 %v689, 0.0
    %v692 = vld [vmem:[%s3 + $0x100] sm:$0xff]
    %v693 = vld [vmem:[%s3 + $0x108] sm:$0xff]
    %v694 = vld [vmem:[%s3 + $0x110] sm:$0xff]
    %v695 = vld [vmem:[%s3 + $0x118] sm:$0xff]
    %v696 = vld [vmem:[%s3 + $0x120] sm:$0xff]
    %v697 = vld [vmem:[%s3 + $0x128] sm:$0xff]
    %v698 = vld [vmem:[%s3 + $0x130] sm:$0xff]
    %v699 = vld [vmem:[%s3 + $0x138] sm:$0xff]
    %v701 = vsel %vm302, %v691, 0
    %703 = vmatpush.msra.mxu0 0.0
    %704 = vmatpush.msra.mxu0 0.0
    %705 = vmatpush.msra.mxu0 0.0
    %706 = vmatpush.msra.mxu0 0.0
    %707 = vmatpush.msra.mxu0 0.0
    %708 = vmatpush.msra.mxu0 0.0
    %709 = vmatpush.msra.mxu0 0.0
    %710 = vmatpush.msra.mxu0 0.0
    %711 = vmatpush.msra.mxu0 %v699
    %712 = vmatpush.msra.mxu0 %v698
    %713 = vmatpush.msra.mxu0 %v697
    %714 = vmatpush.msra.mxu0 %v696
    %715 = vmatpush.msra.mxu0 %v695
    %716 = vmatpush.msra.mxu0 %v694
    %717 = vmatpush.msra.mxu0 %v693
    %718 = vmatpush.msra.mxu0 %v692
    %719 = vmatmul.f32.gmra.mxu0 %v701
    %v720 = vpop.f32.mrf.mxu0
    %v721 = vadd.f32 0.0, %v720
    %722 = vdwg.mxu0
    %v723 = vadd.f32 %v598, %v721
    %s724 = scalar_lea.vmem %s0, 40
    %v725 = vld [vmem:[%s724] sm:$0xff]
    %727 = vst [vmem:[#allocation1] ss:$4 sm:$0xff] %v725
    %v728 = vld.sshfl [vmem:[#allocation1] sm:$0xff pattern:$0x73625140]
    %v729 = vld.sshfl [vmem:[#allocation1 + $0x8] sm:$0xff pattern:$0x73625140]
    %v730 = vld.sshfl [vmem:[#allocation1 + $0x10] sm:$0xff pattern:$0x73625140]
    %v731 = vld.sshfl [vmem:[#allocation1 + $0x18] sm:$0xff pattern:$0x73625140]
    %736 = vmatpush.msra.mxu0 %v48
    %737 = vmatpush.msra.mxu0 %v47
    %738 = vmatpush.msra.mxu0 %v46
    %739 = vmatpush.msra.mxu0 %v45
    %740 = vmatpush.msra.mxu0 %v44
    %741 = vmatpush.msra.mxu0 %v43
    %742 = vmatpush.msra.mxu0 %v42
    %743 = vmatpush.msra.mxu0 %v41
    %744 = vmatpush.msra.mxu0 %v40
    %745 = vmatpush.msra.mxu0 %v39
    %746 = vmatpush.msra.mxu0 %v38
    %747 = vmatpush.msra.mxu0 %v37
    %748 = vmatpush.msra.mxu0 %v36
    %749 = vmatpush.msra.mxu0 %v35
    %750 = vmatpush.msra.mxu0 %v34
    %751 = vmatpush.msra.mxu0 %v33
    %752 = vmatmul.f32.gmra.mxu0 %v728
    %v753 = vpop.f32.mrf.mxu0
    %v754 = vadd.f32 %v100, %v753
    %755 = vdwg.mxu0
    %756 = vmatpush.msra.mxu0 %v64
    %757 = vmatpush.msra.mxu0 %v63
    %758 = vmatpush.msra.mxu0 %v62
    %759 = vmatpush.msra.mxu0 %v61
    %760 = vmatpush.msra.mxu0 %v60
    %761 = vmatpush.msra.mxu0 %v59
    %762 = vmatpush.msra.mxu0 %v58
    %763 = vmatpush.msra.mxu0 %v57
    %764 = vmatpush.msra.mxu0 %v56
    %765 = vmatpush.msra.mxu0 %v55
    %766 = vmatpush.msra.mxu0 %v54
    %767 = vmatpush.msra.mxu0 %v53
    %768 = vmatpush.msra.mxu0 %v52
    %769 = vmatpush.msra.mxu0 %v51
    %770 = vmatpush.msra.mxu0 %v50
    %771 = vmatpush.msra.mxu0 %v49
    %772 = vmatmul.f32.gmra.mxu0 %v729
    %v773 = vpop.f32.mrf.mxu0
    %v774 = vadd.f32 %v754, %v773
    %775 = vdwg.mxu0
    %776 = vmatpush.msra.mxu0 %v80
    %777 = vmatpush.msra.mxu0 %v79
    %778 = vmatpush.msra.mxu0 %v78
    %779 = vmatpush.msra.mxu0 %v77
    %780 = vmatpush.msra.mxu0 %v76
    %781 = vmatpush.msra.mxu0 %v75
    %782 = vmatpush.msra.mxu0 %v74
    %783 = vmatpush.msra.mxu0 %v73
    %784 = vmatpush.msra.mxu0 %v72
    %785 = vmatpush.msra.mxu0 %v71
    %786 = vmatpush.msra.mxu0 %v70
    %787 = vmatpush.msra.mxu0 %v69
    %788 = vmatpush.msra.mxu0 %v68
    %789 = vmatpush.msra.mxu0 %v67
    %790 = vmatpush.msra.mxu0 %v66
    %791 = vmatpush.msra.mxu0 %v65
    %792 = vmatmul.f32.gmra.mxu0 %v730
    %v793 = vpop.f32.mrf.mxu0
    %v794 = vadd.f32 %v774, %v793
    %795 = vdwg.mxu0
    %796 = vmatpush.msra.mxu0 %v96
    %797 = vmatpush.msra.mxu0 %v95
    %798 = vmatpush.msra.mxu0 %v94
    %799 = vmatpush.msra.mxu0 %v93
    %800 = vmatpush.msra.mxu0 %v92
    %801 = vmatpush.msra.mxu0 %v91
    %802 = vmatpush.msra.mxu0 %v90
    %803 = vmatpush.msra.mxu0 %v89
    %804 = vmatpush.msra.mxu0 %v88
    %805 = vmatpush.msra.mxu0 %v87
    %806 = vmatpush.msra.mxu0 %v86
    %807 = vmatpush.msra.mxu0 %v85
    %808 = vmatpush.msra.mxu0 %v84
    %809 = vmatpush.msra.mxu0 %v83
    %810 = vmatpush.msra.mxu0 %v82
    %811 = vmatpush.msra.mxu0 %v81
    %812 = vmatmul.f32.gmra.mxu0 %v731
    %v813 = vpop.f32.mrf.mxu0
    %v814 = vadd.f32 %v794, %v813
    %815 = vdwg.mxu0
    %v816 = vmax.f32 %v814, 0.0
    %v817 = vld [vmem:[%s3 + $0x140] sm:$0xff]
    %v818 = vld [vmem:[%s3 + $0x148] sm:$0xff]
    %v819 = vld [vmem:[%s3 + $0x150] sm:$0xff]
    %v820 = vld [vmem:[%s3 + $0x158] sm:$0xff]
    %v821 = vld [vmem:[%s3 + $0x160] sm:$0xff]
    %v822 = vld [vmem:[%s3 + $0x168] sm:$0xff]
    %v823 = vld [vmem:[%s3 + $0x170] sm:$0xff]
    %v824 = vld [vmem:[%s3 + $0x178] sm:$0xff]
    %v826 = vsel %vm302, %v816, 0
    %828 = vmatpush.msra.mxu0 0.0
    %829 = vmatpush.msra.mxu0 0.0
    %830 = vmatpush.msra.mxu0 0.0
    %831 = vmatpush.msra.mxu0 0.0
    %832 = vmatpush.msra.mxu0 0.0
    %833 = vmatpush.msra.mxu0 0.0
    %834 = vmatpush.msra.mxu0 0.0
    %835 = vmatpush.msra.mxu0 0.0
    %836 = vmatpush.msra.mxu0 %v824
    %837 = vmatpush.msra.mxu0 %v823
    %838 = vmatpush.msra.mxu0 %v822
    %839 = vmatpush.msra.mxu0 %v821
    %840 = vmatpush.msra.mxu0 %v820
    %841 = vmatpush.msra.mxu0 %v819
    %842 = vmatpush.msra.mxu0 %v818
    %843 = vmatpush.msra.mxu0 %v817
    %844 = vmatmul.f32.gmra.mxu0 %v826
    %v845 = vpop.f32.mrf.mxu0
    %v846 = vadd.f32 0.0, %v845
    %847 = vdwg.mxu0
    %v848 = vadd.f32 %v723, %v846
    %s849 = scalar_lea.vmem %s0, 48
    %v850 = vld [vmem:[%s849] sm:$0xff]
    %852 = vst [vmem:[#allocation1] ss:$4 sm:$0xff] %v850
    %v853 = vld.sshfl [vmem:[#allocation1] sm:$0xff pattern:$0x73625140]
    %v854 = vld.sshfl [vmem:[#allocation1 + $0x8] sm:$0xff pattern:$0x73625140]
    %v855 = vld.sshfl [vmem:[#allocation1 + $0x10] sm:$0xff pattern:$0x73625140]
    %v856 = vld.sshfl [vmem:[#allocation1 + $0x18] sm:$0xff pattern:$0x73625140]
    %861 = vmatpush.msra.mxu0 %v48
    %862 = vmatpush.msra.mxu0 %v47
    %863 = vmatpush.msra.mxu0 %v46
    %864 = vmatpush.msra.mxu0 %v45
    %865 = vmatpush.msra.mxu0 %v44
    %866 = vmatpush.msra.mxu0 %v43
    %867 = vmatpush.msra.mxu0 %v42
    %868 = vmatpush.msra.mxu0 %v41
    %869 = vmatpush.msra.mxu0 %v40
    %870 = vmatpush.msra.mxu0 %v39
    %871 = vmatpush.msra.mxu0 %v38
    %872 = vmatpush.msra.mxu0 %v37
    %873 = vmatpush.msra.mxu0 %v36
    %874 = vmatpush.msra.mxu0 %v35
    %875 = vmatpush.msra.mxu0 %v34
    %876 = vmatpush.msra.mxu0 %v33
    %877 = vmatmul.f32.gmra.mxu0 %v853
    %v878 = vpop.f32.mrf.mxu0
    %v879 = vadd.f32 %v100, %v878
    %880 = vdwg.mxu0
    %881 = vmatpush.msra.mxu0 %v64
    %882 = vmatpush.msra.mxu0 %v63
    %883 = vmatpush.msra.mxu0 %v62
    %884 = vmatpush.msra.mxu0 %v61
    %885 = vmatpush.msra.mxu0 %v60
    %886 = vmatpush.msra.mxu0 %v59
    %887 = vmatpush.msra.mxu0 %v58
    %888 = vmatpush.msra.mxu0 %v57
    %889 = vmatpush.msra.mxu0 %v56
    %890 = vmatpush.msra.mxu0 %v55
    %891 = vmatpush.msra.mxu0 %v54
    %892 = vmatpush.msra.mxu0 %v53
    %893 = vmatpush.msra.mxu0 %v52
    %894 = vmatpush.msra.mxu0 %v51
    %895 = vmatpush.msra.mxu0 %v50
    %896 = vmatpush.msra.mxu0 %v49
    %897 = vmatmul.f32.gmra.mxu0 %v854
    %v898 = vpop.f32.mrf.mxu0
    %v899 = vadd.f32 %v879, %v898
    %900 = vdwg.mxu0
    %901 = vmatpush.msra.mxu0 %v80
    %902 = vmatpush.msra.mxu0 %v79
    %903 = vmatpush.msra.mxu0 %v78
    %904 = vmatpush.msra.mxu0 %v77
    %905 = vmatpush.msra.mxu0 %v76
    %906 = vmatpush.msra.mxu0 %v75
    %907 = vmatpush.msra.mxu0 %v74
    %908 = vmatpush.msra.mxu0 %v73
    %909 = vmatpush.msra.mxu0 %v72
    %910 = vmatpush.msra.mxu0 %v71
    %911 = vmatpush.msra.mxu0 %v70
    %912 = vmatpush.msra.mxu0 %v69
    %913 = vmatpush.msra.mxu0 %v68
    %914 = vmatpush.msra.mxu0 %v67
    %915 = vmatpush.msra.mxu0 %v66
    %916 = vmatpush.msra.mxu0 %v65
    %917 = vmatmul.f32.gmra.mxu0 %v855
    %v918 = vpop.f32.mrf.mxu0
    %v919 = vadd.f32 %v899, %v918
    %920 = vdwg.mxu0
    %921 = vmatpush.msra.mxu0 %v96
    %922 = vmatpush.msra.mxu0 %v95
    %923 = vmatpush.msra.mxu0 %v94
    %924 = vmatpush.msra.mxu0 %v93
    %925 = vmatpush.msra.mxu0 %v92
    %926 = vmatpush.msra.mxu0 %v91
    %927 = vmatpush.msra.mxu0 %v90
    %928 = vmatpush.msra.mxu0 %v89
    %929 = vmatpush.msra.mxu0 %v88
    %930 = vmatpush.msra.mxu0 %v87
    %931 = vmatpush.msra.mxu0 %v86
    %932 = vmatpush.msra.mxu0 %v85
    %933 = vmatpush.msra.mxu0 %v84
    %934 = vmatpush.msra.mxu0 %v83
    %935 = vmatpush.msra.mxu0 %v82
    %936 = vmatpush.msra.mxu0 %v81
    %937 = vmatmul.f32.gmra.mxu0 %v856
    %v938 = vpop.f32.mrf.mxu0
    %v939 = vadd.f32 %v919, %v938
    %940 = vdwg.mxu0
    %v941 = vmax.f32 %v939, 0.0
    %v942 = vld [vmem:[%s3 + $0x180] sm:$0xff]
    %v943 = vld [vmem:[%s3 + $0x188] sm:$0xff]
    %v944 = vld [vmem:[%s3 + $0x190] sm:$0xff]
    %v945 = vld [vmem:[%s3 + $0x198] sm:$0xff]
    %v946 = vld [vmem:[%s3 + $0x1a0] sm:$0xff]
    %v947 = vld [vmem:[%s3 + $0x1a8] sm:$0xff]
    %v948 = vld [vmem:[%s3 + $0x1b0] sm:$0xff]
    %v949 = vld [vmem:[%s3 + $0x1b8] sm:$0xff]
    %v951 = vsel %vm302, %v941, 0
    %953 = vmatpush.msra.mxu0 0.0
    %954 = vmatpush.msra.mxu0 0.0
    %955 = vmatpush.msra.mxu0 0.0
    %956 = vmatpush.msra.mxu0 0.0
    %957 = vmatpush.msra.mxu0 0.0
    %958 = vmatpush.msra.mxu0 0.0
    %959 = vmatpush.msra.mxu0 0.0
    %960 = vmatpush.msra.mxu0 0.0
    %961 = vmatpush.msra.mxu0 %v949
    %962 = vmatpush.msra.mxu0 %v948
    %963 = vmatpush.msra.mxu0 %v947
    %964 = vmatpush.msra.mxu0 %v946
    %965 = vmatpush.msra.mxu0 %v945
    %966 = vmatpush.msra.mxu0 %v944
    %967 = vmatpush.msra.mxu0 %v943
    %968 = vmatpush.msra.mxu0 %v942
    %969 = vmatmul.f32.gmra.mxu0 %v951
    %v970 = vpop.f32.mrf.mxu0
    %v971 = vadd.f32 0.0, %v970
    %972 = vdwg.mxu0
    %v973 = vadd.f32 %v848, %v971
    %s974 = scalar_lea.vmem %s0, 56
    %v975 = vld [vmem:[%s974] sm:$0xff]
    %977 = vst [vmem:[#allocation1] ss:$4 sm:$0xff] %v975
    %v978 = vld.sshfl [vmem:[#allocation1] sm:$0xff pattern:$0x73625140]
    %v979 = vld.sshfl [vmem:[#allocation1 + $0x8] sm:$0xff pattern:$0x73625140]
    %v980 = vld.sshfl [vmem:[#allocation1 + $0x10] sm:$0xff pattern:$0x73625140]
    %v981 = vld.sshfl [vmem:[#allocation1 + $0x18] sm:$0xff pattern:$0x73625140]
    %986 = vmatpush.msra.mxu0 %v48
    %987 = vmatpush.msra.mxu0 %v47
    %988 = vmatpush.msra.mxu0 %v46
    %989 = vmatpush.msra.mxu0 %v45
    %990 = vmatpush.msra.mxu0 %v44
    %991 = vmatpush.msra.mxu0 %v43
    %992 = vmatpush.msra.mxu0 %v42
    %993 = vmatpush.msra.mxu0 %v41
    %994 = vmatpush.msra.mxu0 %v40
    %995 = vmatpush.msra.mxu0 %v39
    %996 = vmatpush.msra.mxu0 %v38
    %997 = vmatpush.msra.mxu0 %v37
    %998 = vmatpush.msra.mxu0 %v36
    %999 = vmatpush.msra.mxu0 %v35
    %1000 = vmatpush.msra.mxu0 %v34
    %1001 = vmatpush.msra.mxu0 %v33
    %1002 = vmatmul.f32.gmra.mxu0 %v978
    %v1003 = vpop.f32.mrf.mxu0
    %v1004 = vadd.f32 %v100, %v1003
    %1005 = vdwg.mxu0
    %1006 = vmatpush.msra.mxu0 %v64
    %1007 = vmatpush.msra.mxu0 %v63
    %1008 = vmatpush.msra.mxu0 %v62
    %1009 = vmatpush.msra.mxu0 %v61
    %1010 = vmatpush.msra.mxu0 %v60
    %1011 = vmatpush.msra.mxu0 %v59
    %1012 = vmatpush.msra.mxu0 %v58
    %1013 = vmatpush.msra.mxu0 %v57
    %1014 = vmatpush.msra.mxu0 %v56
    %1015 = vmatpush.msra.mxu0 %v55
    %1016 = vmatpush.msra.mxu0 %v54
    %1017 = vmatpush.msra.mxu0 %v53
    %1018 = vmatpush.msra.mxu0 %v52
    %1019 = vmatpush.msra.mxu0 %v51
    %1020 = vmatpush.msra.mxu0 %v50
    %1021 = vmatpush.msra.mxu0 %v49
    %1022 = vmatmul.f32.gmra.mxu0 %v979
    %v1023 = vpop.f32.mrf.mxu0
    %v1024 = vadd.f32 %v1004, %v1023
    %1025 = vdwg.mxu0
    %1026 = vmatpush.msra.mxu0 %v80
    %1027 = vmatpush.msra.mxu0 %v79
    %1028 = vmatpush.msra.mxu0 %v78
    %1029 = vmatpush.msra.mxu0 %v77
    %1030 = vmatpush.msra.mxu0 %v76
    %1031 = vmatpush.msra.mxu0 %v75
    %1032 = vmatpush.msra.mxu0 %v74
    %1033 = vmatpush.msra.mxu0 %v73
    %1034 = vmatpush.msra.mxu0 %v72
    %1035 = vmatpush.msra.mxu0 %v71
    %1036 = vmatpush.msra.mxu0 %v70
    %1037 = vmatpush.msra.mxu0 %v69
    %1038 = vmatpush.msra.mxu0 %v68
    %1039 = vmatpush.msra.mxu0 %v67
    %1040 = vmatpush.msra.mxu0 %v66
    %1041 = vmatpush.msra.mxu0 %v65
    %1042 = vmatmul.f32.gmra.mxu0 %v980
    %v1043 = vpop.f32.mrf.mxu0
    %v1044 = vadd.f32 %v1024, %v1043
    %1045 = vdwg.mxu0
    %1046 = vmatpush.msra.mxu0 %v96
    %1047 = vmatpush.msra.mxu0 %v95
    %1048 = vmatpush.msra.mxu0 %v94
    %1049 = vmatpush.msra.mxu0 %v93
    %1050 = vmatpush.msra.mxu0 %v92
    %1051 = vmatpush.msra.mxu0 %v91
    %1052 = vmatpush.msra.mxu0 %v90
    %1053 = vmatpush.msra.mxu0 %v89
    %1054 = vmatpush.msra.mxu0 %v88
    %1055 = vmatpush.msra.mxu0 %v87
    %1056 = vmatpush.msra.mxu0 %v86
    %1057 = vmatpush.msra.mxu0 %v85
    %1058 = vmatpush.msra.mxu0 %v84
    %1059 = vmatpush.msra.mxu0 %v83
    %1060 = vmatpush.msra.mxu0 %v82
    %1061 = vmatpush.msra.mxu0 %v81
    %1062 = vmatmul.f32.gmra.mxu0 %v981
    %v1063 = vpop.f32.mrf.mxu0
    %v1064 = vadd.f32 %v1044, %v1063
    %1065 = vdwg.mxu0
    %v1066 = vmax.f32 %v1064, 0.0
    %v1067 = vld [vmem:[%s3 + $0x1c0] sm:$0xff]
    %v1068 = vld [vmem:[%s3 + $0x1c8] sm:$0xff]
    %v1069 = vld [vmem:[%s3 + $0x1d0] sm:$0xff]
    %v1070 = vld [vmem:[%s3 + $0x1d8] sm:$0xff]
    %v1071 = vld [vmem:[%s3 + $0x1e0] sm:$0xff]
    %v1072 = vld [vmem:[%s3 + $0x1e8] sm:$0xff]
    %v1073 = vld [vmem:[%s3 + $0x1f0] sm:$0xff]
    %v1074 = vld [vmem:[%s3 + $0x1f8] sm:$0xff]
    %v1076 = vsel %vm302, %v1066, 0
    %1078 = vmatpush.msra.mxu0 0.0
    %1079 = vmatpush.msra.mxu0 0.0
    %1080 = vmatpush.msra.mxu0 0.0
    %1081 = vmatpush.msra.mxu0 0.0
    %1082 = vmatpush.msra.mxu0 0.0
    %1083 = vmatpush.msra.mxu0 0.0
    %1084 = vmatpush.msra.mxu0 0.0
    %1085 = vmatpush.msra.mxu0 0.0
    %1086 = vmatpush.msra.mxu0 %v1074
    %1087 = vmatpush.msra.mxu0 %v1073
    %1088 = vmatpush.msra.mxu0 %v1072
    %1089 = vmatpush.msra.mxu0 %v1071
    %1090 = vmatpush.msra.mxu0 %v1070
    %1091 = vmatpush.msra.mxu0 %v1069
    %1092 = vmatpush.msra.mxu0 %v1068
    %1093 = vmatpush.msra.mxu0 %v1067
    %1094 = vmatmul.f32.gmra.mxu0 %v1076
    %v1095 = vpop.f32.mrf.mxu0
    %v1096 = vadd.f32 0.0, %v1095
    %1097 = vdwg.mxu0
    %v1098 = vadd.f32 %v973, %v1096
    %s1099 = scalar_lea.vmem %s0, 64
    %v1100 = vld [vmem:[%s1099] sm:$0xff]
    %1102 = vst [vmem:[#allocation1] ss:$4 sm:$0xff] %v1100
    %v1103 = vld.sshfl [vmem:[#allocation1] sm:$0xff pattern:$0x73625140]
    %v1104 = vld.sshfl [vmem:[#allocation1 + $0x8] sm:$0xff pattern:$0x73625140]
    %v1105 = vld.sshfl [vmem:[#allocation1 + $0x10] sm:$0xff pattern:$0x73625140]
    %v1106 = vld.sshfl [vmem:[#allocation1 + $0x18] sm:$0xff pattern:$0x73625140]
    %1111 = vmatpush.msra.mxu0 %v48
    %1112 = vmatpush.msra.mxu0 %v47
    %1113 = vmatpush.msra.mxu0 %v46
    %1114 = vmatpush.msra.mxu0 %v45
    %1115 = vmatpush.msra.mxu0 %v44
    %1116 = vmatpush.msra.mxu0 %v43
    %1117 = vmatpush.msra.mxu0 %v42
    %1118 = vmatpush.msra.mxu0 %v41
    %1119 = vmatpush.msra.mxu0 %v40
    %1120 = vmatpush.msra.mxu0 %v39
    %1121 = vmatpush.msra.mxu0 %v38
    %1122 = vmatpush.msra.mxu0 %v37
    %1123 = vmatpush.msra.mxu0 %v36
    %1124 = vmatpush.msra.mxu0 %v35
    %1125 = vmatpush.msra.mxu0 %v34
    %1126 = vmatpush.msra.mxu0 %v33
    %1127 = vmatmul.f32.gmra.mxu0 %v1103
    %v1128 = vpop.f32.mrf.mxu0
    %v1129 = vadd.f32 %v100, %v1128
    %1130 = vdwg.mxu0
    %1131 = vmatpush.msra.mxu0 %v64
    %1132 = vmatpush.msra.mxu0 %v63
    %1133 = vmatpush.msra.mxu0 %v62
    %1134 = vmatpush.msra.mxu0 %v61
    %1135 = vmatpush.msra.mxu0 %v60
    %1136 = vmatpush.msra.mxu0 %v59
    %1137 = vmatpush.msra.mxu0 %v58
    %1138 = vmatpush.msra.mxu0 %v57
    %1139 = vmatpush.msra.mxu0 %v56
    %1140 = vmatpush.msra.mxu0 %v55
    %1141 = vmatpush.msra.mxu0 %v54
    %1142 = vmatpush.msra.mxu0 %v53
    %1143 = vmatpush.msra.mxu0 %v52
    %1144 = vmatpush.msra.mxu0 %v51
    %1145 = vmatpush.msra.mxu0 %v50
    %1146 = vmatpush.msra.mxu0 %v49
    %1147 = vmatmul.f32.gmra.mxu0 %v1104
    %v1148 = vpop.f32.mrf.mxu0
    %v1149 = vadd.f32 %v1129, %v1148
    %1150 = vdwg.mxu0
    %1151 = vmatpush.msra.mxu0 %v80
    %1152 = vmatpush.msra.mxu0 %v79
    %1153 = vmatpush.msra.mxu0 %v78
    %1154 = vmatpush.msra.mxu0 %v77
    %1155 = vmatpush.msra.mxu0 %v76
    %1156 = vmatpush.msra.mxu0 %v75
    %1157 = vmatpush.msra.mxu0 %v74
    %1158 = vmatpush.msra.mxu0 %v73
    %1159 = vmatpush.msra.mxu0 %v72
    %1160 = vmatpush.msra.mxu0 %v71
    %1161 = vmatpush.msra.mxu0 %v70
    %1162 = vmatpush.msra.mxu0 %v69
    %1163 = vmatpush.msra.mxu0 %v68
    %1164 = vmatpush.msra.mxu0 %v67
    %1165 = vmatpush.msra.mxu0 %v66
    %1166 = vmatpush.msra.mxu0 %v65
    %1167 = vmatmul.f32.gmra.mxu0 %v1105
    %v1168 = vpop.f32.mrf.mxu0
    %v1169 = vadd.f32 %v1149, %v1168
    %1170 = vdwg.mxu0
    %1171 = vmatpush.msra.mxu0 %v96
    %1172 = vmatpush.msra.mxu0 %v95
    %1173 = vmatpush.msra.mxu0 %v94
    %1174 = vmatpush.msra.mxu0 %v93
    %1175 = vmatpush.msra.mxu0 %v92
    %1176 = vmatpush.msra.mxu0 %v91
    %1177 = vmatpush.msra.mxu0 %v90
    %1178 = vmatpush.msra.mxu0 %v89
    %1179 = vmatpush.msra.mxu0 %v88
    %1180 = vmatpush.msra.mxu0 %v87
    %1181 = vmatpush.msra.mxu0 %v86
    %1182 = vmatpush.msra.mxu0 %v85
    %1183 = vmatpush.msra.mxu0 %v84
    %1184 = vmatpush.msra.mxu0 %v83
    %1185 = vmatpush.msra.mxu0 %v82
    %1186 = vmatpush.msra.mxu0 %v81
    %1187 = vmatmul.f32.gmra.mxu0 %v1106
    %v1188 = vpop.f32.mrf.mxu0
    %v1189 = vadd.f32 %v1169, %v1188
    %1190 = vdwg.mxu0
    %v1191 = vmax.f32 %v1189, 0.0
    %v1192 = vld [vmem:[%s3 + $0x200] sm:$0xff]
    %v1193 = vld [vmem:[%s3 + $0x208] sm:$0xff]
    %v1194 = vld [vmem:[%s3 + $0x210] sm:$0xff]
    %v1195 = vld [vmem:[%s3 + $0x218] sm:$0xff]
    %v1196 = vld [vmem:[%s3 + $0x220] sm:$0xff]
    %v1197 = vld [vmem:[%s3 + $0x228] sm:$0xff]
    %v1198 = vld [vmem:[%s3 + $0x230] sm:$0xff]
    %v1199 = vld [vmem:[%s3 + $0x238] sm:$0xff]
    %v1201 = vsel %vm302, %v1191, 0
    %1203 = vmatpush.msra.mxu0 0.0
    %1204 = vmatpush.msra.mxu0 0.0
    %1205 = vmatpush.msra.mxu0 0.0
    %1206 = vmatpush.msra.mxu0 0.0
    %1207 = vmatpush.msra.mxu0 0.0
    %1208 = vmatpush.msra.mxu0 0.0
    %1209 = vmatpush.msra.mxu0 0.0
    %1210 = vmatpush.msra.mxu0 0.0
    %1211 = vmatpush.msra.mxu0 %v1199
    %1212 = vmatpush.msra.mxu0 %v1198
    %1213 = vmatpush.msra.mxu0 %v1197
    %1214 = vmatpush.msra.mxu0 %v1196
    %1215 = vmatpush.msra.mxu0 %v1195
    %1216 = vmatpush.msra.mxu0 %v1194
    %1217 = vmatpush.msra.mxu0 %v1193
    %1218 = vmatpush.msra.mxu0 %v1192
    %1219 = vmatmul.f32.gmra.mxu0 %v1201
    %v1220 = vpop.f32.mrf.mxu0
    %v1221 = vadd.f32 0.0, %v1220
    %1222 = vdwg.mxu0
    %v1223 = vadd.f32 %v1098, %v1221
    %v1224 = vld [vmem:[%s4] sm:$0x1]
    %v1226 = vperm.slane %v1224, 0
    %v1228 = vadd.f32 %v1223, %v1226
    %v1229 = vmax.f32 %v1228, 0.0
    %v1230 = vld [vmem:[%s5] sm:$0xff]
    %v1231 = vld [vmem:[%s5 + $0x8] sm:$0xff]
    %v1232 = vld [vmem:[%s5 + $0x10] sm:$0xff]
    %v1233 = vld [vmem:[%s5 + $0x18] sm:$0xff]
    %v1234 = vld [vmem:[%s5 + $0x20] sm:$0xff]
    %v1235 = vld [vmem:[%s5 + $0x28] sm:$0xff]
    %v1236 = vld [vmem:[%s5 + $0x30] sm:$0xff]
    %v1237 = vld [vmem:[%s5 + $0x38] sm:$0xff]
    %v1238 = vld [vmem:[%s5 + $0x40] sm:$0xff]
    %v1239 = vld [vmem:[%s5 + $0x48] sm:$0xff]
    %v1240 = vld [vmem:[%s5 + $0x50] sm:$0xff]
    %v1241 = vld [vmem:[%s5 + $0x58] sm:$0xff]
    %v1242 = vld [vmem:[%s5 + $0x60] sm:$0xff]
    %v1243 = vld [vmem:[%s5 + $0x68] sm:$0xff]
    %v1244 = vld [vmem:[%s5 + $0x70] sm:$0xff]
    %v1245 = vld [vmem:[%s5 + $0x78] sm:$0xff]
    %v1246 = vld [vmem:[%s5 + $0x80] sm:$0xff]
    %v1247 = vld [vmem:[%s5 + $0x88] sm:$0xff]
    %v1248 = vld [vmem:[%s5 + $0x90] sm:$0xff]
    %v1249 = vld [vmem:[%s5 + $0x98] sm:$0xff]
    %v1250 = vld [vmem:[%s5 + $0xa0] sm:$0xff]
    %v1251 = vld [vmem:[%s5 + $0xa8] sm:$0xff]
    %v1252 = vld [vmem:[%s5 + $0xb0] sm:$0xff]
    %v1253 = vld [vmem:[%s5 + $0xb8] sm:$0xff]
    %v1254 = vld [vmem:[%s5 + $0xc0] sm:$0xff]
    %v1255 = vld [vmem:[%s5 + $0xc8] sm:$0xff]
    %v1256 = vld [vmem:[%s5 + $0xd0] sm:$0xff]
    %v1257 = vld [vmem:[%s5 + $0xd8] sm:$0xff]
    %v1258 = vld [vmem:[%s5 + $0xe0] sm:$0xff]
    %v1259 = vld [vmem:[%s5 + $0xe8] sm:$0xff]
    %v1260 = vld [vmem:[%s5 + $0xf0] sm:$0xff]
    %v1261 = vld [vmem:[%s5 + $0xf8] sm:$0xff]
    %v1262 = vld [vmem:[%s5 + $0x100] sm:$0xff]
    %v1263 = vld [vmem:[%s5 + $0x108] sm:$0xff]
    %v1264 = vld [vmem:[%s5 + $0x110] sm:$0xff]
    %v1265 = vld [vmem:[%s5 + $0x118] sm:$0xff]
    %v1266 = vld [vmem:[%s5 + $0x120] sm:$0xff]
    %v1267 = vld [vmem:[%s5 + $0x128] sm:$0xff]
    %v1268 = vld [vmem:[%s5 + $0x130] sm:$0xff]
    %v1269 = vld [vmem:[%s5 + $0x138] sm:$0xff]
    %v1270 = vld [vmem:[%s5 + $0x140] sm:$0xff]
    %v1271 = vld [vmem:[%s5 + $0x148] sm:$0xff]
    %v1272 = vld [vmem:[%s5 + $0x150] sm:$0xff]
    %v1273 = vld [vmem:[%s5 + $0x158] sm:$0xff]
    %v1274 = vld [vmem:[%s5 + $0x160] sm:$0xff]
    %v1275 = vld [vmem:[%s5 + $0x168] sm:$0xff]
    %v1276 = vld [vmem:[%s5 + $0x170] sm:$0xff]
    %v1277 = vld [vmem:[%s5 + $0x178] sm:$0xff]
    %v1278 = vld [vmem:[%s5 + $0x180] sm:$0xff]
    %v1279 = vld [vmem:[%s5 + $0x188] sm:$0xff]
    %v1280 = vld [vmem:[%s5 + $0x190] sm:$0xff]
    %v1281 = vld [vmem:[%s5 + $0x198] sm:$0xff]
    %v1282 = vld [vmem:[%s5 + $0x1a0] sm:$0xff]
    %v1283 = vld [vmem:[%s5 + $0x1a8] sm:$0xff]
    %v1284 = vld [vmem:[%s5 + $0x1b0] sm:$0xff]
    %v1285 = vld [vmem:[%s5 + $0x1b8] sm:$0xff]
    %v1286 = vld [vmem:[%s5 + $0x1c0] sm:$0xff]
    %v1287 = vld [vmem:[%s5 + $0x1c8] sm:$0xff]
    %v1288 = vld [vmem:[%s5 + $0x1d0] sm:$0xff]
    %v1289 = vld [vmem:[%s5 + $0x1d8] sm:$0xff]
    %v1290 = vld [vmem:[%s5 + $0x1e0] sm:$0xff]
    %v1291 = vld [vmem:[%s5 + $0x1e8] sm:$0xff]
    %v1292 = vld [vmem:[%s5 + $0x1f0] sm:$0xff]
    %v1293 = vld [vmem:[%s5 + $0x1f8] sm:$0xff]
    %v1294 = vld [vmem:[%s6] sm:$0xff]
    %v1296 = vperm.slane %v1294, 0
    %v1297 = vperm.slane %v1294, 1
    %v1298 = vperm.slane %v1294, 2
    %v1299 = vperm.slane %v1294, 3
    %v1300 = vperm.slane %v1294, 4
    %v1301 = vperm.slane %v1294, 5
    %v1302 = vperm.slane %v1294, 6
    %v1303 = vperm.slane %v1294, 7
    %v1313 = vsel %vm302, %v1229, 0
    %1315 = vmatpush.msra.mxu0 0.0
    %1316 = vmatpush.msra.mxu0 0.0
    %1317 = vmatpush.msra.mxu0 0.0
    %1318 = vmatpush.msra.mxu0 0.0
    %1319 = vmatpush.msra.mxu0 0.0
    %1320 = vmatpush.msra.mxu0 0.0
    %1321 = vmatpush.msra.mxu0 0.0
    %1322 = vmatpush.msra.mxu0 0.0
    %1323 = vmatpush.msra.mxu0 %v1286
    %1324 = vmatpush.msra.mxu0 %v1278
    %1325 = vmatpush.msra.mxu0 %v1270
    %1326 = vmatpush.msra.mxu0 %v1262
    %1327 = vmatpush.msra.mxu0 %v1254
    %1328 = vmatpush.msra.mxu0 %v1246
    %1329 = vmatpush.msra.mxu0 %v1238
    %1330 = vmatpush.msra.mxu0 %v1230
    %1331 = vmatmul.f32.gmra.mxu0 %v1313
    %v1332 = vpop.f32.mrf.mxu0
    %v1333 = vadd.f32 %v1296, %v1332
    %1334 = vdwg.mxu0
    %1335 = vmatpush.msra.mxu0 0.0
    %1336 = vmatpush.msra.mxu0 0.0
    %1337 = vmatpush.msra.mxu0 0.0
    %1338 = vmatpush.msra.mxu0 0.0
    %1339 = vmatpush.msra.mxu0 0.0
    %1340 = vmatpush.msra.mxu0 0.0
    %1341 = vmatpush.msra.mxu0 0.0
    %1342 = vmatpush.msra.mxu0 0.0
    %1343 = vmatpush.msra.mxu0 %v1287
    %1344 = vmatpush.msra.mxu0 %v1279
    %1345 = vmatpush.msra.mxu0 %v1271
    %1346 = vmatpush.msra.mxu0 %v1263
    %1347 = vmatpush.msra.mxu0 %v1255
    %1348 = vmatpush.msra.mxu0 %v1247
    %1349 = vmatpush.msra.mxu0 %v1239
    %1350 = vmatpush.msra.mxu0 %v1231
    %1351 = vmatmul.f32.gmra.mxu0 %v1313
    %v1352 = vpop.f32.mrf.mxu0
    %v1353 = vadd.f32 %v1297, %v1352
    %1354 = vdwg.mxu0
    %1355 = vmatpush.msra.mxu0 0.0
    %1356 = vmatpush.msra.mxu0 0.0
    %1357 = vmatpush.msra.mxu0 0.0
    %1358 = vmatpush.msra.mxu0 0.0
    %1359 = vmatpush.msra.mxu0 0.0
    %1360 = vmatpush.msra.mxu0 0.0
    %1361 = vmatpush.msra.mxu0 0.0
    %1362 = vmatpush.msra.mxu0 0.0
    %1363 = vmatpush.msra.mxu0 %v1288
    %1364 = vmatpush.msra.mxu0 %v1280
    %1365 = vmatpush.msra.mxu0 %v1272
    %1366 = vmatpush.msra.mxu0 %v1264
    %1367 = vmatpush.msra.mxu0 %v1256
    %1368 = vmatpush.msra.mxu0 %v1248
    %1369 = vmatpush.msra.mxu0 %v1240
    %1370 = vmatpush.msra.mxu0 %v1232
    %1371 = vmatmul.f32.gmra.mxu0 %v1313
    %v1372 = vpop.f32.mrf.mxu0
    %v1373 = vadd.f32 %v1298, %v1372
    %1374 = vdwg.mxu0
    %1375 = vmatpush.msra.mxu0 0.0
    %1376 = vmatpush.msra.mxu0 0.0
    %1377 = vmatpush.msra.mxu0 0.0
    %1378 = vmatpush.msra.mxu0 0.0
    %1379 = vmatpush.msra.mxu0 0.0
    %1380 = vmatpush.msra.mxu0 0.0
    %1381 = vmatpush.msra.mxu0 0.0
    %1382 = vmatpush.msra.mxu0 0.0
    %1383 = vmatpush.msra.mxu0 %v1289
    %1384 = vmatpush.msra.mxu0 %v1281
    %1385 = vmatpush.msra.mxu0 %v1273
    %1386 = vmatpush.msra.mxu0 %v1265
    %1387 = vmatpush.msra.mxu0 %v1257
    %1388 = vmatpush.msra.mxu0 %v1249
    %1389 = vmatpush.msra.mxu0 %v1241
    %1390 = vmatpush.msra.mxu0 %v1233
    %1391 = vmatmul.f32.gmra.mxu0 %v1313
    %v1392 = vpop.f32.mrf.mxu0
    %v1393 = vadd.f32 %v1299, %v1392
    %1394 = vdwg.mxu0
    %1395 = vmatpush.msra.mxu0 0.0
    %1396 = vmatpush.msra.mxu0 0.0
    %1397 = vmatpush.msra.mxu0 0.0
    %1398 = vmatpush.msra.mxu0 0.0
    %1399 = vmatpush.msra.mxu0 0.0
    %1400 = vmatpush.msra.mxu0 0.0
    %1401 = vmatpush.msra.mxu0 0.0
    %1402 = vmatpush.msra.mxu0 0.0
    %1403 = vmatpush.msra.mxu0 %v1290
    %1404 = vmatpush.msra.mxu0 %v1282
    %1405 = vmatpush.msra.mxu0 %v1274
    %1406 = vmatpush.msra.mxu0 %v1266
    %1407 = vmatpush.msra.mxu0 %v1258
    %1408 = vmatpush.msra.mxu0 %v1250
    %1409 = vmatpush.msra.mxu0 %v1242
    %1410 = vmatpush.msra.mxu0 %v1234
    %1411 = vmatmul.f32.gmra.mxu0 %v1313
    %v1412 = vpop.f32.mrf.mxu0
    %v1413 = vadd.f32 %v1300, %v1412
    %1414 = vdwg.mxu0
    %1415 = vmatpush.msra.mxu0 0.0
    %1416 = vmatpush.msra.mxu0 0.0
    %1417 = vmatpush.msra.mxu0 0.0
    %1418 = vmatpush.msra.mxu0 0.0
    %1419 = vmatpush.msra.mxu0 0.0
    %1420 = vmatpush.msra.mxu0 0.0
    %1421 = vmatpush.msra.mxu0 0.0
    %1422 = vmatpush.msra.mxu0 0.0
    %1423 = vmatpush.msra.mxu0 %v1291
    %1424 = vmatpush.msra.mxu0 %v1283
    %1425 = vmatpush.msra.mxu0 %v1275
    %1426 = vmatpush.msra.mxu0 %v1267
    %1427 = vmatpush.msra.mxu0 %v1259
    %1428 = vmatpush.msra.mxu0 %v1251
    %1429 = vmatpush.msra.mxu0 %v1243
    %1430 = vmatpush.msra.mxu0 %v1235
    %1431 = vmatmul.f32.gmra.mxu0 %v1313
    %v1432 = vpop.f32.mrf.mxu0
    %v1433 = vadd.f32 %v1301, %v1432
    %1434 = vdwg.mxu0
    %1435 = vmatpush.msra.mxu0 0.0
    %1436 = vmatpush.msra.mxu0 0.0
    %1437 = vmatpush.msra.mxu0 0.0
    %1438 = vmatpush.msra.mxu0 0.0
    %1439 = vmatpush.msra.mxu0 0.0
    %1440 = vmatpush.msra.mxu0 0.0
    %1441 = vmatpush.msra.mxu0 0.0
    %1442 = vmatpush.msra.mxu0 0.0
    %1443 = vmatpush.msra.mxu0 %v1292
    %1444 = vmatpush.msra.mxu0 %v1284
    %1445 = vmatpush.msra.mxu0 %v1276
    %1446 = vmatpush.msra.mxu0 %v1268
    %1447 = vmatpush.msra.mxu0 %v1260
    %1448 = vmatpush.msra.mxu0 %v1252
    %1449 = vmatpush.msra.mxu0 %v1244
    %1450 = vmatpush.msra.mxu0 %v1236
    %1451 = vmatmul.f32.gmra.mxu0 %v1313
    %v1452 = vpop.f32.mrf.mxu0
    %v1453 = vadd.f32 %v1302, %v1452
    %1454 = vdwg.mxu0
    %1455 = vmatpush.msra.mxu0 0.0
    %1456 = vmatpush.msra.mxu0 0.0
    %1457 = vmatpush.msra.mxu0 0.0
    %1458 = vmatpush.msra.mxu0 0.0
    %1459 = vmatpush.msra.mxu0 0.0
    %1460 = vmatpush.msra.mxu0 0.0
    %1461 = vmatpush.msra.mxu0 0.0
    %1462 = vmatpush.msra.mxu0 0.0
    %1463 = vmatpush.msra.mxu0 %v1293
    %1464 = vmatpush.msra.mxu0 %v1285
    %1465 = vmatpush.msra.mxu0 %v1277
    %1466 = vmatpush.msra.mxu0 %v1269
    %1467 = vmatpush.msra.mxu0 %v1261
    %1468 = vmatpush.msra.mxu0 %v1253
    %1469 = vmatpush.msra.mxu0 %v1245
    %1470 = vmatpush.msra.mxu0 %v1237
    %1471 = vmatmul.f32.gmra.mxu0 %v1313
    %v1472 = vpop.f32.mrf.mxu0
    %v1473 = vadd.f32 %v1303, %v1472
    %1474 = vdwg.mxu0
    %v1475 = vmax.f32 %v1333, 0.0
    %v1476 = vmax.f32 %v1353, 0.0
    %v1477 = vmax.f32 %v1373, 0.0
    %v1478 = vmax.f32 %v1393, 0.0
    %v1479 = vmax.f32 %v1413, 0.0
    %v1480 = vmax.f32 %v1433, 0.0
    %v1481 = vmax.f32 %v1453, 0.0
    %v1482 = vmax.f32 %v1473, 0.0
    %v1483 = vld [vmem:[%s7] sm:$0xff]
    %v1484 = vld [vmem:[%s7 + $0x8] sm:$0xff]
    %v1485 = vld [vmem:[%s7 + $0x10] sm:$0xff]
    %v1486 = vld [vmem:[%s7 + $0x18] sm:$0xff]
    %v1487 = vld [vmem:[%s7 + $0x20] sm:$0xff]
    %v1488 = vld [vmem:[%s7 + $0x28] sm:$0xff]
    %v1489 = vld [vmem:[%s7 + $0x30] sm:$0xff]
    %v1490 = vld [vmem:[%s7 + $0x38] sm:$0xff]
    %v1491 = vld [vmem:[%s7 + $0x40] sm:$0xff]
    %v1492 = vld [vmem:[%s7 + $0x48] sm:$0xff]
    %v1493 = vld [vmem:[%s7 + $0x50] sm:$0xff]
    %v1494 = vld [vmem:[%s7 + $0x58] sm:$0xff]
    %v1495 = vld [vmem:[%s7 + $0x60] sm:$0xff]
    %v1496 = vld [vmem:[%s7 + $0x68] sm:$0xff]
    %v1497 = vld [vmem:[%s7 + $0x70] sm:$0xff]
    %v1498 = vld [vmem:[%s7 + $0x78] sm:$0xff]
    %v1499 = vld [vmem:[%s7 + $0x80] sm:$0xff]
    %v1500 = vld [vmem:[%s7 + $0x88] sm:$0xff]
    %v1501 = vld [vmem:[%s7 + $0x90] sm:$0xff]
    %v1502 = vld [vmem:[%s7 + $0x98] sm:$0xff]
    %v1503 = vld [vmem:[%s7 + $0xa0] sm:$0xff]
    %v1504 = vld [vmem:[%s7 + $0xa8] sm:$0xff]
    %v1505 = vld [vmem:[%s7 + $0xb0] sm:$0xff]
    %v1506 = vld [vmem:[%s7 + $0xb8] sm:$0xff]
    %v1507 = vld [vmem:[%s7 + $0xc0] sm:$0xff]
    %v1508 = vld [vmem:[%s7 + $0xc8] sm:$0xff]
    %v1509 = vld [vmem:[%s7 + $0xd0] sm:$0xff]
    %v1510 = vld [vmem:[%s7 + $0xd8] sm:$0xff]
    %v1511 = vld [vmem:[%s7 + $0xe0] sm:$0xff]
    %v1512 = vld [vmem:[%s7 + $0xe8] sm:$0xff]
    %v1513 = vld [vmem:[%s7 + $0xf0] sm:$0xff]
    %v1514 = vld [vmem:[%s7 + $0xf8] sm:$0xff]
    %v1515 = vld [vmem:[%s7 + $0x100] sm:$0xff]
    %v1516 = vld [vmem:[%s7 + $0x108] sm:$0xff]
    %v1517 = vld [vmem:[%s7 + $0x110] sm:$0xff]
    %v1518 = vld [vmem:[%s7 + $0x118] sm:$0xff]
    %v1519 = vld [vmem:[%s7 + $0x120] sm:$0xff]
    %v1520 = vld [vmem:[%s7 + $0x128] sm:$0xff]
    %v1521 = vld [vmem:[%s7 + $0x130] sm:$0xff]
    %v1522 = vld [vmem:[%s7 + $0x138] sm:$0xff]
    %v1523 = vld [vmem:[%s7 + $0x140] sm:$0xff]
    %v1524 = vld [vmem:[%s7 + $0x148] sm:$0xff]
    %v1525 = vld [vmem:[%s7 + $0x150] sm:$0xff]
    %v1526 = vld [vmem:[%s7 + $0x158] sm:$0xff]
    %v1527 = vld [vmem:[%s7 + $0x160] sm:$0xff]
    %v1528 = vld [vmem:[%s7 + $0x168] sm:$0xff]
    %v1529 = vld [vmem:[%s7 + $0x170] sm:$0xff]
    %v1530 = vld [vmem:[%s7 + $0x178] sm:$0xff]
    %v1531 = vld [vmem:[%s7 + $0x180] sm:$0xff]
    %v1532 = vld [vmem:[%s7 + $0x188] sm:$0xff]
    %v1533 = vld [vmem:[%s7 + $0x190] sm:$0xff]
    %v1534 = vld [vmem:[%s7 + $0x198] sm:$0xff]
    %v1535 = vld [vmem:[%s7 + $0x1a0] sm:$0xff]
    %v1536 = vld [vmem:[%s7 + $0x1a8] sm:$0xff]
    %v1537 = vld [vmem:[%s7 + $0x1b0] sm:$0xff]
    %v1538 = vld [vmem:[%s7 + $0x1b8] sm:$0xff]
    %v1539 = vld [vmem:[%s7 + $0x1c0] sm:$0xff]
    %v1540 = vld [vmem:[%s7 + $0x1c8] sm:$0xff]
    %v1541 = vld [vmem:[%s7 + $0x1d0] sm:$0xff]
    %v1542 = vld [vmem:[%s7 + $0x1d8] sm:$0xff]
    %v1543 = vld [vmem:[%s7 + $0x1e0] sm:$0xff]
    %v1544 = vld [vmem:[%s7 + $0x1e8] sm:$0xff]
    %v1545 = vld [vmem:[%s7 + $0x1f0] sm:$0xff]
    %v1546 = vld [vmem:[%s7 + $0x1f8] sm:$0xff]
    %v1547 = vld [vmem:[%s7 + $0x200] sm:$0xff]
    %v1548 = vld [vmem:[%s7 + $0x208] sm:$0xff]
    %v1549 = vld [vmem:[%s7 + $0x210] sm:$0xff]
    %v1550 = vld [vmem:[%s7 + $0x218] sm:$0xff]
    %v1551 = vld [vmem:[%s7 + $0x220] sm:$0xff]
    %v1552 = vld [vmem:[%s7 + $0x228] sm:$0xff]
    %v1553 = vld [vmem:[%s7 + $0x230] sm:$0xff]
    %v1554 = vld [vmem:[%s7 + $0x238] sm:$0xff]
    %v1555 = vld [vmem:[%s7 + $0x240] sm:$0xff]
    %v1556 = vld [vmem:[%s7 + $0x248] sm:$0xff]
    %v1557 = vld [vmem:[%s7 + $0x250] sm:$0xff]
    %v1558 = vld [vmem:[%s7 + $0x258] sm:$0xff]
    %v1559 = vld [vmem:[%s7 + $0x260] sm:$0xff]
    %v1560 = vld [vmem:[%s7 + $0x268] sm:$0xff]
    %v1561 = vld [vmem:[%s7 + $0x270] sm:$0xff]
    %v1562 = vld [vmem:[%s7 + $0x278] sm:$0xff]
    %v1563 = vld [vmem:[%s7 + $0x280] sm:$0xff]
    %v1564 = vld [vmem:[%s7 + $0x288] sm:$0xff]
    %v1565 = vld [vmem:[%s7 + $0x290] sm:$0xff]
    %v1566 = vld [vmem:[%s7 + $0x298] sm:$0xff]
    %v1567 = vld [vmem:[%s7 + $0x2a0] sm:$0xff]
    %v1568 = vld [vmem:[%s7 + $0x2a8] sm:$0xff]
    %v1569 = vld [vmem:[%s7 + $0x2b0] sm:$0xff]
    %v1570 = vld [vmem:[%s7 + $0x2b8] sm:$0xff]
    %v1571 = vld [vmem:[%s7 + $0x2c0] sm:$0xff]
    %v1572 = vld [vmem:[%s7 + $0x2c8] sm:$0xff]
    %v1573 = vld [vmem:[%s7 + $0x2d0] sm:$0xff]
    %v1574 = vld [vmem:[%s7 + $0x2d8] sm:$0xff]
    %v1575 = vld [vmem:[%s7 + $0x2e0] sm:$0xff]
    %v1576 = vld [vmem:[%s7 + $0x2e8] sm:$0xff]
    %v1577 = vld [vmem:[%s7 + $0x2f0] sm:$0xff]
    %v1578 = vld [vmem:[%s7 + $0x2f8] sm:$0xff]
    %v1579 = vld [vmem:[%s7 + $0x300] sm:$0xff]
    %v1580 = vld [vmem:[%s7 + $0x308] sm:$0xff]
    %v1581 = vld [vmem:[%s7 + $0x310] sm:$0xff]
    %v1582 = vld [vmem:[%s7 + $0x318] sm:$0xff]
    %v1583 = vld [vmem:[%s7 + $0x320] sm:$0xff]
    %v1584 = vld [vmem:[%s7 + $0x328] sm:$0xff]
    %v1585 = vld [vmem:[%s7 + $0x330] sm:$0xff]
    %v1586 = vld [vmem:[%s7 + $0x338] sm:$0xff]
    %v1587 = vld [vmem:[%s7 + $0x340] sm:$0xff]
    %v1588 = vld [vmem:[%s7 + $0x348] sm:$0xff]
    %v1589 = vld [vmem:[%s7 + $0x350] sm:$0xff]
    %v1590 = vld [vmem:[%s7 + $0x358] sm:$0xff]
    %v1591 = vld [vmem:[%s7 + $0x360] sm:$0xff]
    %v1592 = vld [vmem:[%s7 + $0x368] sm:$0xff]
    %v1593 = vld [vmem:[%s7 + $0x370] sm:$0xff]
    %v1594 = vld [vmem:[%s7 + $0x378] sm:$0xff]
    %v1595 = vld [vmem:[%s7 + $0x380] sm:$0xff]
    %v1596 = vld [vmem:[%s7 + $0x388] sm:$0xff]
    %v1597 = vld [vmem:[%s7 + $0x390] sm:$0xff]
    %v1598 = vld [vmem:[%s7 + $0x398] sm:$0xff]
    %v1599 = vld [vmem:[%s7 + $0x3a0] sm:$0xff]
    %v1600 = vld [vmem:[%s7 + $0x3a8] sm:$0xff]
    %v1601 = vld [vmem:[%s7 + $0x3b0] sm:$0xff]
    %v1602 = vld [vmem:[%s7 + $0x3b8] sm:$0xff]
    %v1603 = vld [vmem:[%s7 + $0x3c0] sm:$0xff]
    %v1604 = vld [vmem:[%s7 + $0x3c8] sm:$0xff]
    %v1605 = vld [vmem:[%s7 + $0x3d0] sm:$0xff]
    %v1606 = vld [vmem:[%s7 + $0x3d8] sm:$0xff]
    %v1607 = vld [vmem:[%s7 + $0x3e0] sm:$0xff]
    %v1608 = vld [vmem:[%s7 + $0x3e8] sm:$0xff]
    %v1609 = vld [vmem:[%s7 + $0x3f0] sm:$0xff]
    %v1610 = vld [vmem:[%s7 + $0x3f8] sm:$0xff]
    %v1611 = vld [vmem:[%s8] sm:$0x1]
    %v1613 = vperm.slane %v1611, 0
    %1615 = vmatpush.msra.mxu0 %v1498
    %1616 = vmatpush.msra.mxu0 %v1497
    %1617 = vmatpush.msra.mxu0 %v1496
    %1618 = vmatpush.msra.mxu0 %v1495
    %1619 = vmatpush.msra.mxu0 %v1494
    %1620 = vmatpush.msra.mxu0 %v1493
    %1621 = vmatpush.msra.mxu0 %v1492
    %1622 = vmatpush.msra.mxu0 %v1491
    %1623 = vmatpush.msra.mxu0 %v1490
    %1624 = vmatpush.msra.mxu0 %v1489
    %1625 = vmatpush.msra.mxu0 %v1488
    %1626 = vmatpush.msra.mxu0 %v1487
    %1627 = vmatpush.msra.mxu0 %v1486
    %1628 = vmatpush.msra.mxu0 %v1485
    %1629 = vmatpush.msra.mxu0 %v1484
    %1630 = vmatpush.msra.mxu0 %v1483
    %1631 = vmatmul.f32.gmra.mxu0 %v1475
    %v1632 = vpop.f32.mrf.mxu0
    %v1633 = vadd.f32 %v1613, %v1632
    %1634 = vdwg.mxu0
    %1635 = vmatpush.msra.mxu0 %v1514
    %1636 = vmatpush.msra.mxu0 %v1513
    %1637 = vmatpush.msra.mxu0 %v1512
    %1638 = vmatpush.msra.mxu0 %v1511
    %1639 = vmatpush.msra.mxu0 %v1510
    %1640 = vmatpush.msra.mxu0 %v1509
    %1641 = vmatpush.msra.mxu0 %v1508
    %1642 = vmatpush.msra.mxu0 %v1507
    %1643 = vmatpush.msra.mxu0 %v1506
    %1644 = vmatpush.msra.mxu0 %v1505
    %1645 = vmatpush.msra.mxu0 %v1504
    %1646 = vmatpush.msra.mxu0 %v1503
    %1647 = vmatpush.msra.mxu0 %v1502
    %1648 = vmatpush.msra.mxu0 %v1501
    %1649 = vmatpush.msra.mxu0 %v1500
    %1650 = vmatpush.msra.mxu0 %v1499
    %1651 = vmatmul.f32.gmra.mxu0 %v1476
    %v1652 = vpop.f32.mrf.mxu0
    %v1653 = vadd.f32 %v1633, %v1652
    %1654 = vdwg.mxu0
    %1655 = vmatpush.msra.mxu0 %v1530
    %1656 = vmatpush.msra.mxu0 %v1529
    %1657 = vmatpush.msra.mxu0 %v1528
    %1658 = vmatpush.msra.mxu0 %v1527
    %1659 = vmatpush.msra.mxu0 %v1526
    %1660 = vmatpush.msra.mxu0 %v1525
    %1661 = vmatpush.msra.mxu0 %v1524
    %1662 = vmatpush.msra.mxu0 %v1523
    %1663 = vmatpush.msra.mxu0 %v1522
    %1664 = vmatpush.msra.mxu0 %v1521
    %1665 = vmatpush.msra.mxu0 %v1520
    %1666 = vmatpush.msra.mxu0 %v1519
    %1667 = vmatpush.msra.mxu0 %v1518
    %1668 = vmatpush.msra.mxu0 %v1517
    %1669 = vmatpush.msra.mxu0 %v1516
    %1670 = vmatpush.msra.mxu0 %v1515
    %1671 = vmatmul.f32.gmra.mxu0 %v1477
    %v1672 = vpop.f32.mrf.mxu0
    %v1673 = vadd.f32 %v1653, %v1672
    %1674 = vdwg.mxu0
    %1675 = vmatpush.msra.mxu0 %v1546
    %1676 = vmatpush.msra.mxu0 %v1545
    %1677 = vmatpush.msra.mxu0 %v1544
    %1678 = vmatpush.msra.mxu0 %v1543
    %1679 = vmatpush.msra.mxu0 %v1542
    %1680 = vmatpush.msra.mxu0 %v1541
    %1681 = vmatpush.msra.mxu0 %v1540
    %1682 = vmatpush.msra.mxu0 %v1539
    %1683 = vmatpush.msra.mxu0 %v1538
    %1684 = vmatpush.msra.mxu0 %v1537
    %1685 = vmatpush.msra.mxu0 %v1536
    %1686 = vmatpush.msra.mxu0 %v1535
    %1687 = vmatpush.msra.mxu0 %v1534
    %1688 = vmatpush.msra.mxu0 %v1533
    %1689 = vmatpush.msra.mxu0 %v1532
    %1690 = vmatpush.msra.mxu0 %v1531
    %1691 = vmatmul.f32.gmra.mxu0 %v1478
    %v1692 = vpop.f32.mrf.mxu0
    %v1693 = vadd.f32 %v1673, %v1692
    %1694 = vdwg.mxu0
    %1695 = vmatpush.msra.mxu0 %v1562
    %1696 = vmatpush.msra.mxu0 %v1561
    %1697 = vmatpush.msra.mxu0 %v1560
    %1698 = vmatpush.msra.mxu0 %v1559
    %1699 = vmatpush.msra.mxu0 %v1558
    %1700 = vmatpush.msra.mxu0 %v1557
    %1701 = vmatpush.msra.mxu0 %v1556
    %1702 = vmatpush.msra.mxu0 %v1555
    %1703 = vmatpush.msra.mxu0 %v1554
    %1704 = vmatpush.msra.mxu0 %v1553
    %1705 = vmatpush.msra.mxu0 %v1552
    %1706 = vmatpush.msra.mxu0 %v1551
    %1707 = vmatpush.msra.mxu0 %v1550
    %1708 = vmatpush.msra.mxu0 %v1549
    %1709 = vmatpush.msra.mxu0 %v1548
    %1710 = vmatpush.msra.mxu0 %v1547
    %1711 = vmatmul.f32.gmra.mxu0 %v1479
    %v1712 = vpop.f32.mrf.mxu0
    %v1713 = vadd.f32 %v1693, %v1712
    %1714 = vdwg.mxu0
    %1715 = vmatpush.msra.mxu0 %v1578
    %1716 = vmatpush.msra.mxu0 %v1577
    %1717 = vmatpush.msra.mxu0 %v1576
    %1718 = vmatpush.msra.mxu0 %v1575
    %1719 = vmatpush.msra.mxu0 %v1574
    %1720 = vmatpush.msra.mxu0 %v1573
    %1721 = vmatpush.msra.mxu0 %v1572
    %1722 = vmatpush.msra.mxu0 %v1571
    %1723 = vmatpush.msra.mxu0 %v1570
    %1724 = vmatpush.msra.mxu0 %v1569
    %1725 = vmatpush.msra.mxu0 %v1568
    %1726 = vmatpush.msra.mxu0 %v1567
    %1727 = vmatpush.msra.mxu0 %v1566
    %1728 = vmatpush.msra.mxu0 %v1565
    %1729 = vmatpush.msra.mxu0 %v1564
    %1730 = vmatpush.msra.mxu0 %v1563
    %1731 = vmatmul.f32.gmra.mxu0 %v1480
    %v1732 = vpop.f32.mrf.mxu0
    %v1733 = vadd.f32 %v1713, %v1732
    %1734 = vdwg.mxu0
    %1735 = vmatpush.msra.mxu0 %v1594
    %1736 = vmatpush.msra.mxu0 %v1593
    %1737 = vmatpush.msra.mxu0 %v1592
    %1738 = vmatpush.msra.mxu0 %v1591
    %1739 = vmatpush.msra.mxu0 %v1590
    %1740 = vmatpush.msra.mxu0 %v1589
    %1741 = vmatpush.msra.mxu0 %v1588
    %1742 = vmatpush.msra.mxu0 %v1587
    %1743 = vmatpush.msra.mxu0 %v1586
    %1744 = vmatpush.msra.mxu0 %v1585
    %1745 = vmatpush.msra.mxu0 %v1584
    %1746 = vmatpush.msra.mxu0 %v1583
    %1747 = vmatpush.msra.mxu0 %v1582
    %1748 = vmatpush.msra.mxu0 %v1581
    %1749 = vmatpush.msra.mxu0 %v1580
    %1750 = vmatpush.msra.mxu0 %v1579
    %1751 = vmatmul.f32.gmra.mxu0 %v1481
    %v1752 = vpop.f32.mrf.mxu0
    %v1753 = vadd.f32 %v1733, %v1752
    %1754 = vdwg.mxu0
    %1755 = vmatpush.msra.mxu0 %v1610
    %1756 = vmatpush.msra.mxu0 %v1609
    %1757 = vmatpush.msra.mxu0 %v1608
    %1758 = vmatpush.msra.mxu0 %v1607
    %1759 = vmatpush.msra.mxu0 %v1606
    %1760 = vmatpush.msra.mxu0 %v1605
    %1761 = vmatpush.msra.mxu0 %v1604
    %1762 = vmatpush.msra.mxu0 %v1603
    %1763 = vmatpush.msra.mxu0 %v1602
    %1764 = vmatpush.msra.mxu0 %v1601
    %1765 = vmatpush.msra.mxu0 %v1600
    %1766 = vmatpush.msra.mxu0 %v1599
    %1767 = vmatpush.msra.mxu0 %v1598
    %1768 = vmatpush.msra.mxu0 %v1597
    %1769 = vmatpush.msra.mxu0 %v1596
    %1770 = vmatpush.msra.mxu0 %v1595
    %1771 = vmatmul.f32.gmra.mxu0 %v1482
    %v1772 = vpop.f32.mrf.mxu0
    %v1773 = vadd.f32 %v1753, %v1772
    %1774 = vdwg.mxu0
    %vm1775 = vcmask 41984
    %1776 = vst.msk [vmem:[#allocation2] sm:$0x3] %vm1775, %v1773
    // Predicated region
    $region38: #{duelnet_forward.3} parent=1 // pred_check
      _
    $region39: #{duelnet_forward.3} parent=1 // pred_check_branch
      %1778 = sbr.rel (0) target = $region41
    $region40: #{duelnet_forward.3} parent=1 // pred_region
      %1780 = vsyncadd [#allocation3], 0
      %s1782 = sshll.u32 [#allocation2], 4
      %s1783 = int_to_ptr.vmem [resolvable:$true] %s1782
      %s1784 = sshll.u32 %s9, 4
      %s1785 = int_to_ptr.hbm [resolvable:$true] %s1784
      %1787 = dma.vmem_to_hbm [thread:$0]  %s1783, 32, %s1785, [#allocation3]
    $region41: #{duelnet_forward.3} parent=1 // pred_fallthru
      _
    // Predicated region
    $region42: #{duelnet_forward.3} parent=1 // pred_check
      _
    $region43: #{duelnet_forward.3} parent=1 // pred_check_branch
      %1789 = sbr.rel (0) target = $region45
    $region44: #{duelnet_forward.3} parent=1 // pred_region
      %1791 = dma.done [#allocation3], 32
    $region45: #{duelnet_forward.3} parent=1 // pred_fallthru
      _
    %1792 = vsyncpa [#allocation3], 1

</llo_original>
